<compile_context>
chip_gen: v7x
topology: tpu7x:2x2x1
jax: 0.10.0
libtpu: 0.0.40
codegen_flags: <defaults>
</compile_context>

<pallas_src>
import math
import functools

import jax
import jax.numpy as jnp
from jax.experimental import pallas as pl
from jax.experimental.pallas import tpu as pltpu


# ----------------------------------------------------------------------------
# helpers
# ----------------------------------------------------------------------------
def _erf(x):
    # Abramowitz & Stegun 7.1.26 polynomial approximation of erf (f32-class
    # accuracy).  Inner divide uses the EUP approx reciprocal (separate slot).
    a1, a2, a3, a4, a5 = 0.254829592, -0.284496736, 1.421413741, -1.453152027, 1.061405429
    p_ = 0.3275911
    sign = jnp.where(x >= 0.0, 1.0, -1.0)
    ax = jnp.abs(x)
    t = pl.reciprocal(1.0 + p_ * ax, approx=True)
    poly = ((((a5 * t + a4) * t + a3) * t + a2) * t + a1) * t
    return sign * (1.0 - poly * jnp.exp(-ax * ax))


# ----------------------------------------------------------------------------
# Fused kernel: shift/scale + standardization + synthetic model + HL-Gauss CE
# ----------------------------------------------------------------------------
def _fused_cepo_kernel(ctx_ref, qry_ref, w_ref, out_ref, *,
                       hidden, nbins, offs, sigma, bin_width, vmin, inv_temp):
    f32, bf16 = jnp.float32, jnp.bfloat16
    G, Nc, LANE = ctx_ref.shape
    Nq = qry_ref.shape[1]
    H, NB = hidden, nbins

    ctx = ctx_ref[...]                                   # (G, Nc, 128)
    qry = qry_ref[...]                                   # (G, Nq, 128)

    # -------- packed weights (single resident DMA) --------
    W_big = w_ref[pl.ds(offs["W_big"], LANE), :]         # (128, 128) fused embed+QKVM
    wy_f = w_ref[pl.ds(offs["wy_f"], 1), :]              # (1, 128)   w_y @ W_fused
    W_m = w_ref[pl.ds(offs["W_m"], H), :H]               # (H, H)
    b_m = w_ref[pl.ds(offs["b_m"], 1), :H]               # (1, H)
    W_o = w_ref[pl.ds(offs["W_out"], H), :NB]            # (H, NB)
    b_o = w_ref[pl.ds(offs["b_out"], 1), :NB]            # (1, NB)
    if inv_temp != 1.0:                                  # static trace-time fold
        W_o = W_o * inv_temp
        b_o = b_o * inv_temp

    # -------- treated / control shift & scale (two-pass masked mean / var) ----
    t = ctx[:, :, 0:1]                                   # (G, Nc, 1)
    y = ctx[:, :, LANE - 3:LANE - 2]                     # (G, Nc, 1) raw y
    tm = (t == 1.0).astype(f32)
    cm = (t == 0.0).astype(f32)
    tc = jnp.sum(tm, axis=1, keepdims=True)              # (G, 1, 1)
    cc = jnp.sum(cm, axis=1, keepdims=True)
    tc_s = jnp.maximum(tc, 1.0)
    cc_s = jnp.maximum(cc, 1.0)
    # exact divides for these per-batch scalars (accuracy, negligible cost)
    y1m = jnp.sum(y * tm, axis=1, keepdims=True) / tc_s
    y0m = jnp.sum(y * cm, axis=1, keepdims=True) / cc_s
    y1v = jnp.sum((y - y1m) ** 2 * tm, axis=1, keepdims=True) / tc_s
    y0v = jnp.sum((y - y0m) ** 2 * cm, axis=1, keepdims=True) / cc_s
    y1s = jnp.sqrt(y1v) + 1e-20
    y0s = jnp.sqrt(y0v) + 1e-20
    y0_scale = jnp.where(cc > 0, y0s, y1s)
    y1_scale = jnp.where(tc > 0, y1s, y0s)
    y0_shift = jnp.where(cc > 0, y0m, y1m)
    y1_shift = jnp.where(tc > 0, y1m, y0m)
    inv0 = 1.0 / y0_scale
    inv1 = 1.0 / y1_scale
    y_std = jnp.where(t == 1.0, (y - y1_shift) * inv1, (y - y0_shift) * inv0)   # (G,Nc,1)

    # -------- standardized targets for the queries --------
    rt = qry[:, :, 0:1]                                  # (G, Nq, 1) in {0., 1.}
    ey0 = qry[:, :, LANE - 2:LANE - 1]
    ey1 = qry[:, :, LANE - 1:LANE]
    ey_target = jnp.where(rt == 0.0, (ey0 - y0_shift) * inv0, (ey1 - y1_shift) * inv1)

    # -------- fused embed + Q/K/V/MLP projection (K=128, N=128 bf16 MXU) --------
    ctx_f = ctx.reshape(G * Nc, LANE)
    qry_f = qry.reshape(G * Nq, LANE)
    Wb = W_big.astype(bf16)
    proj_c = jnp.dot(ctx_f.astype(bf16), Wb, preferred_element_type=f32)   # (G*Nc,128)
    proj_c = proj_c + y_std.reshape(G * Nc, 1) * wy_f                      # y_std -> K/V
    proj_q = jnp.dot(qry_f.astype(bf16), Wb, preferred_element_type=f32)   # (G*Nq,128)

    q = proj_q[:, 0 * H:1 * H].reshape(G, Nq, H)         # already scaled by 1/sqrt(H)
    m_e = proj_q[:, 3 * H:4 * H]                         # e_qry @ W_mlp (flat)
    k = proj_c[:, 1 * H:2 * H].reshape(G, Nc, H)
    v = proj_c[:, 2 * H:3 * H].reshape(G, Nc, H)

    # -------- per-batch cross attention (queries attend to context) --------
    s = jnp.einsum("gqh,gkh->gqk", q.astype(bf16), k.astype(bf16),
                   preferred_element_type=f32)           # (G, Nq, Nc)
    s = s - jnp.max(s, axis=-1, keepdims=True)
    p = jnp.exp(s)
    p = p * pl.reciprocal(jnp.sum(p, axis=-1, keepdims=True), approx=True)
    z = jnp.einsum("gqk,gkh->gqh", p.astype(bf16), v.astype(bf16),
                   preferred_element_type=f32)           # (G, Nq, H)

    # -------- MLP + output head --------
    h = jnp.maximum(
        m_e + jnp.dot(z.reshape(G * Nq, H).astype(bf16), W_m.astype(bf16),
                      preferred_element_type=f32) + b_m, 0.0)              # (G*Nq, H)
    logits = jnp.dot(h.astype(bf16), W_o.astype(bf16),
                     preferred_element_type=f32) + b_o                     # (G*Nq, NB)
    logits = logits.reshape(G, Nq, NB)

    # -------- HL-Gauss soft targets: single erf sweep over the NB+1 edges -----
    edge_i = jax.lax.broadcasted_iota(jnp.int32, (1, 1, NB + 1), 2).astype(f32)
    edges = vmin + edge_i * bin_width                    # e_0 .. e_NB (33 lanes)
    inv_s2 = 1.0 / (math.sqrt(2.0) * sigma)
    cdf = 0.5 * (1.0 + _erf((edges - ey_target) * inv_s2))   # (G, Nq, NB+1)
    tgt = cdf[:, :, 1:] - cdf[:, :, :NB]                 # (G, Nq, NB)
    tgt = tgt * pl.reciprocal(jnp.sum(tgt, axis=-1, keepdims=True) + 1e-8, approx=True)

    # -------- log-softmax cross-entropy, mean over queries --------
    mx = jnp.max(logits, axis=-1, keepdims=True)
    sh = logits - mx
    lse = jnp.log(jnp.sum(jnp.exp(sh), axis=-1, keepdims=True))
    log_probs = sh - lse
    ce = -jnp.sum(tgt * log_probs, axis=-1, keepdims=True)                 # (G, Nq, 1)
    loss = jnp.sum(ce, axis=1) * (1.0 / Nq)              # (G, 1)
    # one lane-dense row per batch (unmasked 128-lane store)
    out_ref[...] = jnp.broadcast_to(loss, out_ref.shape)


# ----------------------------------------------------------------------------
# Module wrapper
# ----------------------------------------------------------------------------
class InContextModelPallas:
    _LANE = 128

    def __init__(self, nbins=32, num_features=8, hidden=32,
                 sigma=0.5, vmin=-10.0, vmax=10.0, key=None):
        if key is None:
            key = jax.random.PRNGKey(42)
        self.nbins = nbins
        self.num_features = num_features
        self.hidden = hidden
        self.sigma = sigma
        self.vmin = float(vmin)
        self.vmax = float(vmax)
        self.bin_width = float((vmax - vmin) / nbins)

        F, H, NB, LANE = num_features, hidden, nbins, self._LANE
        assert 4 * H <= LANE, "hidden too large for the fused 128-lane projection"
        assert NB <= LANE
        assert F <= LANE - 3, "num_features must leave room for the y/E_y lanes"

        ks = jax.random.split(key, 8)
        W_emb = jax.random.normal(ks[0], (F, H), jnp.float32) / math.sqrt(F)
        w_y = jax.random.normal(ks[1], (1, H), jnp.float32) / math.sqrt(H)
        W_q = jax.random.normal(ks[2], (H, H), jnp.float32) / math.sqrt(H)
        W_k = jax.random.normal(ks[3], (H, H), jnp.float32) / math.sqrt(H)
        W_v = jax.random.normal(ks[4], (H, H), jnp.float32) / math.sqrt(H)
        W_mlp = jax.random.normal(ks[5], (H, H), jnp.float32) / math.sqrt(H)
        b_mlp = jnp.zeros((1, H), jnp.float32)
        W_out = jax.random.normal(ks[6], (H, NB), jnp.float32) / math.sqrt(H)
        b_out = jnp.zeros((1, NB), jnp.float32)

        # Lane layout of the packed inputs: [t | X(cols 1..F-1) | 0.. | y | ey0 | ey1].
        # W_embA maps those 128 lanes to the embedding (y/ey lanes -> zero rows),
        # matching pad_x semantics (zero-padded feature columns contribute 0).
        W_embA = jnp.zeros((LANE, H), jnp.float32)
        W_embA = W_embA.at[0].set(W_emb[0])              # treatment column row
        W_embA = W_embA.at[1:F].set(W_emb[1:])           # feature rows
        # Fused projection [W_q/sqrt(H) | W_k | W_v | W_mlp] -> 4H = 128 lanes.
        W_fused = jnp.concatenate([W_q / math.sqrt(H), W_k, W_v, W_mlp], axis=1)
        W_fused = jnp.pad(W_fused, ((0, 0), (0, LANE - 4 * H)))
        W_big = W_embA @ W_fused                          # (128, 128)
        wy_f = w_y @ W_fused                              # (1, 128)

        # ---- pack everything into one sublane-aligned (R, 128) f32 buffer ----
        segs = [("W_big", W_big), ("wy_f", wy_f), ("W_m", W_mlp), ("b_m", b_mlp),
                ("W_out", W_out), ("b_out", b_out)]
        offs, rows, off = {}, [], 0
        for name, a in segs:
            offs[name] = off
            r, c = a.shape
            rpad = (-r) % 8
            rows.append(jnp.pad(a, ((0, rpad), (0, LANE - c))).astype(jnp.float32))
            off += r + rpad
        self.w_offsets = offs
        self.W_packed = jnp.concatenate(rows, axis=0)     # (R, 128), one DMA

    @staticmethod
    def _pick_group(B, max_group=8):
        # largest divisor of B (<= max_group) that keeps >= 2 grid steps
        g_best = 1
        for g in range(1, min(B, max_group) + 1):
            if B % g == 0 and (B // g >= 2 or B == 1):
                g_best = g
        return g_best

    # -------------------- cepo_losses / forward --------------------
    def cepo_losses(self, X_context, t_context, y_context, X_query,
                    E_y0_query, E_y1_query, rng_key, sigma=None, temperature=1.0):
        sigma = float(sigma) if sigma is not None else self.sigma
        f32 = jnp.float32
        LANE = self._LANE
        B, Nc, d = X_context.shape
        Nq = X_query.shape[1]
        assert d + 1 <= self.num_features, "more input features than the model supports"
        # TODO(synk): pad + mask ragged context/query lengths instead of asserting.
        assert Nc % 8 == 0 and Nq % 8 == 0, "context/query lengths must be multiples of 8"

        # random treatment assignment for queries (torch.randint equivalent)
        rt = jax.random.randint(rng_key, (B, Nq), 0, 2).astype(f32)

        # lane-dense packed inputs: 2 DMA streams instead of 7 lane-sparse ones
        ctx_pack = jnp.concatenate(
            [t_context[..., None].astype(f32),
             X_context.astype(f32),
             jnp.zeros((B, Nc, LANE - d - 4), f32),
             y_context[..., None].astype(f32),
             jnp.zeros((B, Nc, 2), f32)], axis=-1)                      # (B, Nc, 128)
        qry_pack = jnp.concatenate(
            [rt[..., None],
             X_query.astype(f32),
             jnp.zeros((B, Nq, LANE - d - 4), f32),
             jnp.zeros((B, Nq, 1), f32),
             E_y0_query[..., None].astype(f32),
             E_y1_query[..., None].astype(f32)], axis=-1)               # (B, Nq, 128)

        G = self._pick_group(B)
        kernel = functools.partial(
            _fused_cepo_kernel,
            hidden=self.hidden, nbins=self.nbins, offs=self.w_offsets,
            sigma=sigma, bin_width=self.bin_width, vmin=self.vmin,
            inv_temp=1.0 / float(temperature),
        )
        R = self.W_packed.shape[0]

        out = pl.pallas_call(
            kernel,
            out_shape=jax.ShapeDtypeStruct((B // G, G, LANE), f32),
            grid=(B // G,),
            in_specs=[
                pl.BlockSpec((G, Nc, LANE), lambda b: (b, 0, 0)),   # packed context
                pl.BlockSpec((G, Nq, LANE), lambda b: (b, 0, 0)),   # packed queries
                pl.BlockSpec((R, LANE), lambda b: (0, 0)),          # packed weights
            ],
            out_specs=pl.BlockSpec((None, G, LANE), lambda b: (b, 0, 0)),
            compiler_params=pltpu.CompilerParams(dimension_semantics=("parallel",)),
        )(ctx_pack, qry_pack, self.W_packed)

        # per-batch loss sits in lane 0 of its lane-dense row
        return out.reshape(B, LANE)[:, 0]

    def forward(self, X_context, t_context, y_context, X_query,
                E_y0_query, E_y1_query, rng_key, sigma=None, temperature=1.0):
        return self.cepo_losses(X_context, t_context, y_context, X_query,
                                E_y0_query, E_y1_query, rng_key,
                                sigma=sigma, temperature=temperature)


# ----------------------------------------------------------------------------
if __name__ == "__main__":
    key = jax.random.PRNGKey(0)
    keys = jax.random.split(key, 8)

    B, Nc, Nq, nfeat = 4, 8, 8, 4
    nbins, num_features, hidden = 32, 8, 32

    X_context = jax.random.normal(keys[0], (B, Nc, nfeat), jnp.float32)
    # Ensure both treated and control units exist in every batch.
    t_context = jnp.tile(jnp.array([0., 1., 0., 1., 1., 0., 1., 0.], jnp.float32), (B, 1))
    y_context = jax.random.normal(keys[1], (B, Nc), jnp.float32)
    X_query = jax.random.normal(keys[2], (B, Nq, nfeat), jnp.float32)
    E_y0_query = jax.random.normal(keys[3], (B, Nq), jnp.float32)
    E_y1_query = jax.random.normal(keys[4], (B, Nq), jnp.float32)

    model = InContextModelPallas(nbins=nbins, num_features=num_features,
                                 hidden=hidden, sigma=0.5, key=keys[5])

    loss = model.forward(X_context, t_context, y_context, X_query,
                         E_y0_query, E_y1_query, rng_key=keys[6])
    loss = jax.block_until_ready(loss)

    assert loss.shape == (B,), loss.shape
    assert bool(jnp.all(jnp.isfinite(loss)))
    print("KERNEL_OK")
</pallas_src>

<mosaic_0001>
module attributes {stable_mosaic.version = 11 : i64} {
  func.func @_fused_cepo_kernel(%arg0: i32, %arg1: memref<2x8x128xf32, #tpu.memory_space<vmem>>, %arg2: memref<2x8x128xf32, #tpu.memory_space<vmem>>, %arg3: memref<216x128xf32, #tpu.memory_space<vmem>>, %arg4: memref<1x2x128xf32, #tpu.memory_space<vmem>>) attributes {dimension_semantics = [#tpu.dimension_semantics<parallel>], iteration_bounds = array<i64: 2>, scalar_prefetch = 0 : i64, scratch_operands = 0 : i64, tpu.core_type = #tpu.core_type<tc>, window_params = [{transform_indices = @transform_0, window_bounds = array<i64: 2, 8, 128>}, {transform_indices = @transform_1, window_bounds = array<i64: 2, 8, 128>}, {pipeline_mode = #tpu.pipeline_mode<synchronous>, transform_indices = @transform_2, window_bounds = array<i64: 216, 128>}, {transform_indices = @transform_3, window_bounds = array<i64: 1, 2, 128>}]} {
    %c0 = arith.constant 0 : index
    %c0_0 = arith.constant 0 : index
    %c0_1 = arith.constant 0 : index
    %0 = vector.load %arg1[%c0, %c0_0, %c0_1] : memref<2x8x128xf32, #tpu.memory_space<vmem>>, vector<2x8x128xf32>
    %c0_2 = arith.constant 0 : index
    %c0_3 = arith.constant 0 : index
    %c0_4 = arith.constant 0 : index
    %1 = vector.load %arg2[%c0_2, %c0_3, %c0_4] : memref<2x8x128xf32, #tpu.memory_space<vmem>>, vector<2x8x128xf32>
    %c0_5 = arith.constant 0 : index
    %c0_6 = arith.constant 0 : index
    %2 = vector.load %arg3[%c0_5, %c0_6] : memref<216x128xf32, #tpu.memory_space<vmem>>, vector<128x128xf32>
    %c128 = arith.constant 128 : index
    %c0_7 = arith.constant 0 : index
    %3 = vector.load %arg3[%c128, %c0_7] : memref<216x128xf32, #tpu.memory_space<vmem>>, vector<1x128xf32>
    %c136 = arith.constant 136 : index
    %c0_8 = arith.constant 0 : index
    %4 = vector.load %arg3[%c136, %c0_8] : memref<216x128xf32, #tpu.memory_space<vmem>>, vector<32x32xf32>
    %c168 = arith.constant 168 : index
    %c0_9 = arith.constant 0 : index
    %5 = vector.load %arg3[%c168, %c0_9] : memref<216x128xf32, #tpu.memory_space<vmem>>, vector<1x32xf32>
    %c176 = arith.constant 176 : index
    %c0_10 = arith.constant 0 : index
    %6 = vector.load %arg3[%c176, %c0_10] : memref<216x128xf32, #tpu.memory_space<vmem>>, vector<32x32xf32>
    %c208 = arith.constant 208 : index
    %c0_11 = arith.constant 0 : index
    %7 = vector.load %arg3[%c208, %c0_11] : memref<216x128xf32, #tpu.memory_space<vmem>>, vector<1x32xf32>
    %8 = vector.extract_strided_slice %0 {offsets = [0, 0, 0], sizes = [2, 8, 1], strides = [1, 1, 1]} : vector<2x8x128xf32> to vector<2x8x1xf32>
    %9 = vector.extract_strided_slice %0 {offsets = [0, 0, 125], sizes = [2, 8, 1], strides = [1, 1, 1]} : vector<2x8x128xf32> to vector<2x8x1xf32>
    %cst = arith.constant 1.000000e+00 : f32
    %10 = vector.broadcast %cst : f32 to vector<2x8x1xf32>
    %11 = arith.cmpf oeq, %8, %10 : vector<2x8x1xf32>
    %12 = arith.extui %11 : vector<2x8x1xi1> to vector<2x8x1xi32>
    %13 = arith.sitofp %12 : vector<2x8x1xi32> to vector<2x8x1xf32>
    %cst_12 = arith.constant 0.000000e+00 : f32
    %14 = vector.broadcast %cst_12 : f32 to vector<2x8x1xf32>
    %15 = arith.cmpf oeq, %8, %14 : vector<2x8x1xf32>
    %16 = arith.extui %15 : vector<2x8x1xi1> to vector<2x8x1xi32>
    %17 = arith.sitofp %16 : vector<2x8x1xi32> to vector<2x8x1xf32>
    %cst_13 = arith.constant dense<0.000000e+00> : vector<2x1xf32>
    %18 = vector.multi_reduction <add>, %13, %cst_13 [1] : vector<2x8x1xf32> to vector<2x1xf32>
    %19 = vector.shape_cast %18 : vector<2x1xf32> to vector<2x1x1xf32>
    %cst_14 = arith.constant dense<0.000000e+00> : vector<2x1xf32>
    %20 = vector.multi_reduction <add>, %17, %cst_14 [1] : vector<2x8x1xf32> to vector<2x1xf32>
    %21 = vector.shape_cast %20 : vector<2x1xf32> to vector<2x1x1xf32>
    %cst_15 = arith.constant 1.000000e+00 : f32
    %22 = vector.broadcast %cst_15 : f32 to vector<2x1x1xf32>
    %23 = arith.maximumf %19, %22 : vector<2x1x1xf32>
    %cst_16 = arith.constant 1.000000e+00 : f32
    %24 = vector.broadcast %cst_16 : f32 to vector<2x1x1xf32>
    %25 = arith.maximumf %21, %24 : vector<2x1x1xf32>
    %26 = arith.mulf %9, %13 : vector<2x8x1xf32>
    %cst_17 = arith.constant dense<0.000000e+00> : vector<2x1xf32>
    %27 = vector.multi_reduction <add>, %26, %cst_17 [1] : vector<2x8x1xf32> to vector<2x1xf32>
    %28 = vector.shape_cast %27 : vector<2x1xf32> to vector<2x1x1xf32>
    %29 = arith.divf %28, %23 : vector<2x1x1xf32>
    %30 = arith.mulf %9, %17 : vector<2x8x1xf32>
    %cst_18 = arith.constant dense<0.000000e+00> : vector<2x1xf32>
    %31 = vector.multi_reduction <add>, %30, %cst_18 [1] : vector<2x8x1xf32> to vector<2x1xf32>
    %32 = vector.shape_cast %31 : vector<2x1xf32> to vector<2x1x1xf32>
    %33 = arith.divf %32, %25 : vector<2x1x1xf32>
    %34 = vector.broadcast %29 : vector<2x1x1xf32> to vector<2x8x1xf32>
    %35 = arith.subf %9, %34 : vector<2x8x1xf32>
    %36 = arith.mulf %35, %35 : vector<2x8x1xf32>
    %37 = arith.mulf %36, %13 : vector<2x8x1xf32>
    %cst_19 = arith.constant dense<0.000000e+00> : vector<2x1xf32>
    %38 = vector.multi_reduction <add>, %37, %cst_19 [1] : vector<2x8x1xf32> to vector<2x1xf32>
    %39 = vector.shape_cast %38 : vector<2x1xf32> to vector<2x1x1xf32>
    %40 = arith.divf %39, %23 : vector<2x1x1xf32>
    %41 = vector.broadcast %33 : vector<2x1x1xf32> to vector<2x8x1xf32>
    %42 = arith.subf %9, %41 : vector<2x8x1xf32>
    %43 = arith.mulf %42, %42 : vector<2x8x1xf32>
    %44 = arith.mulf %43, %17 : vector<2x8x1xf32>
    %cst_20 = arith.constant dense<0.000000e+00> : vector<2x1xf32>
    %45 = vector.multi_reduction <add>, %44, %cst_20 [1] : vector<2x8x1xf32> to vector<2x1xf32>
    %46 = vector.shape_cast %45 : vector<2x1xf32> to vector<2x1x1xf32>
    %47 = arith.divf %46, %25 : vector<2x1x1xf32>
    %48 = math.sqrt %40 : vector<2x1x1xf32>
    %cst_21 = arith.constant 9.99999968E-21 : f32
    %49 = vector.broadcast %cst_21 : f32 to vector<2x1x1xf32>
    %50 = arith.addf %48, %49 : vector<2x1x1xf32>
    %51 = math.sqrt %47 : vector<2x1x1xf32>
    %cst_22 = arith.constant 9.99999968E-21 : f32
    %52 = vector.broadcast %cst_22 : f32 to vector<2x1x1xf32>
    %53 = arith.addf %51, %52 : vector<2x1x1xf32>
    %cst_23 = arith.constant 0.000000e+00 : f32
    %54 = vector.broadcast %cst_23 : f32 to vector<2x1x1xf32>
    %55 = arith.cmpf ogt, %21, %54 : vector<2x1x1xf32>
    %56 = arith.select %55, %53, %50 : vector<2x1x1xi1>, vector<2x1x1xf32>
    %cst_24 = arith.constant 0.000000e+00 : f32
    %57 = vector.broadcast %cst_24 : f32 to vector<2x1x1xf32>
    %58 = arith.cmpf ogt, %19, %57 : vector<2x1x1xf32>
    %59 = arith.select %58, %50, %53 : vector<2x1x1xi1>, vector<2x1x1xf32>
    %cst_25 = arith.constant 0.000000e+00 : f32
    %60 = vector.broadcast %cst_25 : f32 to vector<2x1x1xf32>
    %61 = arith.cmpf ogt, %21, %60 : vector<2x1x1xf32>
    %62 = arith.select %61, %33, %29 : vector<2x1x1xi1>, vector<2x1x1xf32>
    %cst_26 = arith.constant 0.000000e+00 : f32
    %63 = vector.broadcast %cst_26 : f32 to vector<2x1x1xf32>
    %64 = arith.cmpf ogt, %19, %63 : vector<2x1x1xf32>
    %65 = arith.select %64, %29, %33 : vector<2x1x1xi1>, vector<2x1x1xf32>
    %cst_27 = arith.constant 1.000000e+00 : f32
    %66 = vector.broadcast %cst_27 : f32 to vector<2x1x1xf32>
    %67 = arith.divf %66, %56 : vector<2x1x1xf32>
    %cst_28 = arith.constant 1.000000e+00 : f32
    %68 = vector.broadcast %cst_28 : f32 to vector<2x1x1xf32>
    %69 = arith.divf %68, %59 : vector<2x1x1xf32>
    %cst_29 = arith.constant 1.000000e+00 : f32
    %70 = vector.broadcast %cst_29 : f32 to vector<2x8x1xf32>
    %71 = arith.cmpf oeq, %8, %70 : vector<2x8x1xf32>
    %72 = vector.broadcast %65 : vector<2x1x1xf32> to vector<2x8x1xf32>
    %73 = arith.subf %9, %72 : vector<2x8x1xf32>
    %74 = vector.broadcast %69 : vector<2x1x1xf32> to vector<2x8x1xf32>
    %75 = arith.mulf %73, %74 : vector<2x8x1xf32>
    %76 = vector.broadcast %62 : vector<2x1x1xf32> to vector<2x8x1xf32>
    %77 = arith.subf %9, %76 : vector<2x8x1xf32>
    %78 = vector.broadcast %67 : vector<2x1x1xf32> to vector<2x8x1xf32>
    %79 = arith.mulf %77, %78 : vector<2x8x1xf32>
    %80 = arith.select %71, %75, %79 : vector<2x8x1xi1>, vector<2x8x1xf32>
    %81 = vector.extract_strided_slice %1 {offsets = [0, 0, 0], sizes = [2, 8, 1], strides = [1, 1, 1]} : vector<2x8x128xf32> to vector<2x8x1xf32>
    %82 = vector.extract_strided_slice %1 {offsets = [0, 0, 126], sizes = [2, 8, 1], strides = [1, 1, 1]} : vector<2x8x128xf32> to vector<2x8x1xf32>
    %83 = vector.extract_strided_slice %1 {offsets = [0, 0, 127], sizes = [2, 8, 1], strides = [1, 1, 1]} : vector<2x8x128xf32> to vector<2x8x1xf32>
    %cst_30 = arith.constant 0.000000e+00 : f32
    %84 = vector.broadcast %cst_30 : f32 to vector<2x8x1xf32>
    %85 = arith.cmpf oeq, %81, %84 : vector<2x8x1xf32>
    %86 = vector.broadcast %62 : vector<2x1x1xf32> to vector<2x8x1xf32>
    %87 = arith.subf %82, %86 : vector<2x8x1xf32>
    %88 = vector.broadcast %67 : vector<2x1x1xf32> to vector<2x8x1xf32>
    %89 = arith.mulf %87, %88 : vector<2x8x1xf32>
    %90 = vector.broadcast %65 : vector<2x1x1xf32> to vector<2x8x1xf32>
    %91 = arith.subf %83, %90 : vector<2x8x1xf32>
    %92 = vector.broadcast %69 : vector<2x1x1xf32> to vector<2x8x1xf32>
    %93 = arith.mulf %91, %92 : vector<2x8x1xf32>
    %94 = arith.select %85, %89, %93 : vector<2x8x1xi1>, vector<2x8x1xf32>
    %95 = vector.shape_cast %0 : vector<2x8x128xf32> to vector<16x128xf32>
    %96 = vector.shape_cast %1 : vector<2x8x128xf32> to vector<16x128xf32>
    %97 = arith.truncf %2 : vector<128x128xf32> to vector<128x128xbf16>
    %98 = arith.truncf %95 : vector<16x128xf32> to vector<16x128xbf16>
    %cst_31 = arith.constant dense<0.000000e+00> : vector<16x128xf32>
    %99 = tpu.matmul %98, %97, %cst_31 {dimension_numbers = #tpu.dot_dimension_numbers<[1], [0], [0], [1], [0, 0, 1, 1], [], []>} : vector<16x128xbf16>, vector<128x128xbf16>, vector<16x128xf32> -> vector<16x128xf32>
    %100 = vector.shape_cast %80 : vector<2x8x1xf32> to vector<16x1xf32>
    %101 = vector.broadcast %100 : vector<16x1xf32> to vector<16x128xf32>
    %102 = vector.broadcast %3 : vector<1x128xf32> to vector<16x128xf32>
    %103 = arith.mulf %101, %102 : vector<16x128xf32>
    %104 = arith.addf %99, %103 : vector<16x128xf32>
    %105 = arith.truncf %96 : vector<16x128xf32> to vector<16x128xbf16>
    %cst_32 = arith.constant dense<0.000000e+00> : vector<16x128xf32>
    %106 = tpu.matmul %105, %97, %cst_32 {dimension_numbers = #tpu.dot_dimension_numbers<[1], [0], [0], [1], [0, 0, 1, 1], [], []>} : vector<16x128xbf16>, vector<128x128xbf16>, vector<16x128xf32> -> vector<16x128xf32>
    %107 = vector.extract_strided_slice %106 {offsets = [0, 0], sizes = [16, 32], strides = [1, 1]} : vector<16x128xf32> to vector<16x32xf32>
    %108 = vector.shape_cast %107 : vector<16x32xf32> to vector<2x8x32xf32>
    %109 = vector.extract_strided_slice %106 {offsets = [0, 96], sizes = [16, 32], strides = [1, 1]} : vector<16x128xf32> to vector<16x32xf32>
    %110 = vector.extract_strided_slice %104 {offsets = [0, 32], sizes = [16, 32], strides = [1, 1]} : vector<16x128xf32> to vector<16x32xf32>
    %111 = vector.shape_cast %110 : vector<16x32xf32> to vector<2x8x32xf32>
    %112 = vector.extract_strided_slice %104 {offsets = [0, 64], sizes = [16, 32], strides = [1, 1]} : vector<16x128xf32> to vector<16x32xf32>
    %113 = vector.shape_cast %112 : vector<16x32xf32> to vector<2x8x32xf32>
    %114 = arith.truncf %108 : vector<2x8x32xf32> to vector<2x8x32xbf16>
    %115 = arith.truncf %111 : vector<2x8x32xf32> to vector<2x8x32xbf16>
    "tpu.trace_start"() <{level = 10 : i32, message = "gqh,gkh->gqk"}> : () -> ()
    %cst_33 = arith.constant dense<0.000000e+00> : vector<2x8x8xf32>
    %116 = tpu.matmul %114, %115, %cst_33 {dimension_numbers = #tpu.dot_dimension_numbers<[2], [2], [1], [1], [0, 0, 0, 1, 1, 1], [0], [0]>} : vector<2x8x32xbf16>, vector<2x8x32xbf16>, vector<2x8x8xf32> -> vector<2x8x8xf32>
    "tpu.trace_stop"() : () -> ()
    %cst_34 = arith.constant dense<0xFF800000> : vector<2x8xf32>
    %117 = vector.multi_reduction <maximumf>, %116, %cst_34 [2] : vector<2x8x8xf32> to vector<2x8xf32>
    %118 = vector.shape_cast %117 : vector<2x8xf32> to vector<2x8x1xf32>
    %119 = vector.broadcast %118 : vector<2x8x1xf32> to vector<2x8x8xf32>
    %120 = arith.subf %116, %119 : vector<2x8x8xf32>
    %121 = math.exp %120 : vector<2x8x8xf32>
    %cst_35 = arith.constant dense<0.000000e+00> : vector<2x8xf32>
    %122 = vector.multi_reduction <add>, %121, %cst_35 [2] : vector<2x8x8xf32> to vector<2x8xf32>
    %123 = vector.shape_cast %122 : vector<2x8xf32> to vector<2x8x1xf32>
    %124 = tpu.reciprocal %123 {approx = true} : vector<2x8x1xf32> -> vector<2x8x1xf32>
    %125 = vector.broadcast %124 : vector<2x8x1xf32> to vector<2x8x8xf32>
    %126 = arith.mulf %121, %125 : vector<2x8x8xf32>
    %127 = arith.truncf %126 : vector<2x8x8xf32> to vector<2x8x8xbf16>
    %128 = arith.truncf %113 : vector<2x8x32xf32> to vector<2x8x32xbf16>
    "tpu.trace_start"() <{level = 10 : i32, message = "gqk,gkh->gqh"}> : () -> ()
    %cst_36 = arith.constant dense<0.000000e+00> : vector<2x8x32xf32>
    %129 = tpu.matmul %127, %128, %cst_36 {dimension_numbers = #tpu.dot_dimension_numbers<[2], [1], [1], [2], [0, 0, 0, 1, 1, 2], [0], [0]>} : vector<2x8x8xbf16>, vector<2x8x32xbf16>, vector<2x8x32xf32> -> vector<2x8x32xf32>
    "tpu.trace_stop"() : () -> ()
    %130 = vector.shape_cast %129 : vector<2x8x32xf32> to vector<16x32xf32>
    %131 = arith.truncf %130 : vector<16x32xf32> to vector<16x32xbf16>
    %132 = arith.truncf %4 : vector<32x32xf32> to vector<32x32xbf16>
    %cst_37 = arith.constant dense<0.000000e+00> : vector<16x32xf32>
    %133 = tpu.matmul %131, %132, %cst_37 {dimension_numbers = #tpu.dot_dimension_numbers<[1], [0], [0], [1], [0, 0, 1, 1], [], []>} : vector<16x32xbf16>, vector<32x32xbf16>, vector<16x32xf32> -> vector<16x32xf32>
    %134 = arith.addf %109, %133 : vector<16x32xf32>
    %135 = vector.broadcast %5 : vector<1x32xf32> to vector<16x32xf32>
    %136 = arith.addf %134, %135 : vector<16x32xf32>
    %cst_38 = arith.constant 0.000000e+00 : f32
    %137 = vector.broadcast %cst_38 : f32 to vector<16x32xf32>
    %138 = arith.maximumf %136, %137 : vector<16x32xf32>
    %139 = arith.truncf %138 : vector<16x32xf32> to vector<16x32xbf16>
    %140 = arith.truncf %6 : vector<32x32xf32> to vector<32x32xbf16>
    %cst_39 = arith.constant dense<0.000000e+00> : vector<16x32xf32>
    %141 = tpu.matmul %139, %140, %cst_39 {dimension_numbers = #tpu.dot_dimension_numbers<[1], [0], [0], [1], [0, 0, 1, 1], [], []>} : vector<16x32xbf16>, vector<32x32xbf16>, vector<16x32xf32> -> vector<16x32xf32>
    %142 = vector.broadcast %7 : vector<1x32xf32> to vector<16x32xf32>
    %143 = arith.addf %141, %142 : vector<16x32xf32>
    %144 = vector.shape_cast %143 : vector<16x32xf32> to vector<2x8x32xf32>
    %145 = tpu.iota {dimensions = array<i32: 2>} : vector<1x1x33xi32>
    %146 = arith.sitofp %145 : vector<1x1x33xi32> to vector<1x1x33xf32>
    %cst_40 = arith.constant 6.250000e-01 : f32
    %147 = vector.broadcast %cst_40 : f32 to vector<1x1x33xf32>
    %148 = arith.mulf %146, %147 : vector<1x1x33xf32>
    %cst_41 = arith.constant -1.000000e+01 : f32
    %149 = vector.broadcast %cst_41 : f32 to vector<1x1x33xf32>
    %150 = arith.addf %149, %148 : vector<1x1x33xf32>
    %151 = vector.broadcast %150 : vector<1x1x33xf32> to vector<2x8x33xf32>
    %152 = vector.broadcast %94 : vector<2x8x1xf32> to vector<2x8x33xf32>
    %153 = arith.subf %151, %152 : vector<2x8x33xf32>
    %cst_42 = arith.constant 1.41421354 : f32
    %154 = vector.broadcast %cst_42 : f32 to vector<2x8x33xf32>
    %155 = arith.mulf %153, %154 : vector<2x8x33xf32>
    %cst_43 = arith.constant 0.000000e+00 : f32
    %156 = vector.broadcast %cst_43 : f32 to vector<2x8x33xf32>
    %157 = arith.cmpf oge, %155, %156 : vector<2x8x33xf32>
    %cst_44 = arith.constant 1.000000e+00 : f32
    %cst_45 = arith.constant -1.000000e+00 : f32
    %158 = vector.broadcast %cst_44 : f32 to vector<2x8x33xf32>
    %159 = vector.broadcast %cst_45 : f32 to vector<2x8x33xf32>
    %160 = arith.select %157, %158, %159 : vector<2x8x33xi1>, vector<2x8x33xf32>
    %161 = math.absf %155 : vector<2x8x33xf32>
    %cst_46 = arith.constant 0.327591091 : f32
    %162 = vector.broadcast %cst_46 : f32 to vector<2x8x33xf32>
    %163 = arith.mulf %162, %161 : vector<2x8x33xf32>
    %cst_47 = arith.constant 1.000000e+00 : f32
    %164 = vector.broadcast %cst_47 : f32 to vector<2x8x33xf32>
    %165 = arith.addf %164, %163 : vector<2x8x33xf32>
    %166 = tpu.reciprocal %165 {approx = true} : vector<2x8x33xf32> -> vector<2x8x33xf32>
    %cst_48 = arith.constant 1.06140542 : f32
    %167 = vector.broadcast %cst_48 : f32 to vector<2x8x33xf32>
    %168 = arith.mulf %167, %166 : vector<2x8x33xf32>
    %cst_49 = arith.constant -1.45315206 : f32
    %169 = vector.broadcast %cst_49 : f32 to vector<2x8x33xf32>
    %170 = arith.addf %168, %169 : vector<2x8x33xf32>
    %171 = arith.mulf %170, %166 : vector<2x8x33xf32>
    %cst_50 = arith.constant 1.42141378 : f32
    %172 = vector.broadcast %cst_50 : f32 to vector<2x8x33xf32>
    %173 = arith.addf %171, %172 : vector<2x8x33xf32>
    %174 = arith.mulf %173, %166 : vector<2x8x33xf32>
    %cst_51 = arith.constant -0.284496725 : f32
    %175 = vector.broadcast %cst_51 : f32 to vector<2x8x33xf32>
    %176 = arith.addf %174, %175 : vector<2x8x33xf32>
    %177 = arith.mulf %176, %166 : vector<2x8x33xf32>
    %cst_52 = arith.constant 0.254829586 : f32
    %178 = vector.broadcast %cst_52 : f32 to vector<2x8x33xf32>
    %179 = arith.addf %177, %178 : vector<2x8x33xf32>
    %180 = arith.mulf %179, %166 : vector<2x8x33xf32>
    %cst_53 = arith.constant 0.000000e+00 : f32
    %181 = vector.broadcast %cst_53 : f32 to vector<2x8x33xf32>
    %182 = arith.subf %181, %161 : vector<2x8x33xf32>
    %183 = arith.mulf %182, %161 : vector<2x8x33xf32>
    %184 = math.exp %183 : vector<2x8x33xf32>
    %185 = arith.mulf %180, %184 : vector<2x8x33xf32>
    %cst_54 = arith.constant 1.000000e+00 : f32
    %186 = vector.broadcast %cst_54 : f32 to vector<2x8x33xf32>
    %187 = arith.subf %186, %185 : vector<2x8x33xf32>
    %188 = arith.mulf %160, %187 : vector<2x8x33xf32>
    %cst_55 = arith.constant 1.000000e+00 : f32
    %189 = vector.broadcast %cst_55 : f32 to vector<2x8x33xf32>
    %190 = arith.addf %189, %188 : vector<2x8x33xf32>
    %cst_56 = arith.constant 5.000000e-01 : f32
    %191 = vector.broadcast %cst_56 : f32 to vector<2x8x33xf32>
    %192 = arith.mulf %191, %190 : vector<2x8x33xf32>
    %193 = vector.extract_strided_slice %192 {offsets = [0, 0, 1], sizes = [2, 8, 32], strides = [1, 1, 1]} : vector<2x8x33xf32> to vector<2x8x32xf32>
    %194 = vector.extract_strided_slice %192 {offsets = [0, 0, 0], sizes = [2, 8, 32], strides = [1, 1, 1]} : vector<2x8x33xf32> to vector<2x8x32xf32>
    %195 = arith.subf %193, %194 : vector<2x8x32xf32>
    %cst_57 = arith.constant dense<0.000000e+00> : vector<2x8xf32>
    %196 = vector.multi_reduction <add>, %195, %cst_57 [2] : vector<2x8x32xf32> to vector<2x8xf32>
    %197 = vector.shape_cast %196 : vector<2x8xf32> to vector<2x8x1xf32>
    %cst_58 = arith.constant 9.99999993E-9 : f32
    %198 = vector.broadcast %cst_58 : f32 to vector<2x8x1xf32>
    %199 = arith.addf %197, %198 : vector<2x8x1xf32>
    %200 = tpu.reciprocal %199 {approx = true} : vector<2x8x1xf32> -> vector<2x8x1xf32>
    %201 = vector.broadcast %200 : vector<2x8x1xf32> to vector<2x8x32xf32>
    %202 = arith.mulf %195, %201 : vector<2x8x32xf32>
    %cst_59 = arith.constant dense<0xFF800000> : vector<2x8xf32>
    %203 = vector.multi_reduction <maximumf>, %144, %cst_59 [2] : vector<2x8x32xf32> to vector<2x8xf32>
    %204 = vector.shape_cast %203 : vector<2x8xf32> to vector<2x8x1xf32>
    %205 = vector.broadcast %204 : vector<2x8x1xf32> to vector<2x8x32xf32>
    %206 = arith.subf %144, %205 : vector<2x8x32xf32>
    %207 = math.exp %206 : vector<2x8x32xf32>
    %cst_60 = arith.constant dense<0.000000e+00> : vector<2x8xf32>
    %208 = vector.multi_reduction <add>, %207, %cst_60 [2] : vector<2x8x32xf32> to vector<2x8xf32>
    %209 = vector.shape_cast %208 : vector<2x8xf32> to vector<2x8x1xf32>
    %210 = math.log %209 : vector<2x8x1xf32>
    %211 = vector.broadcast %210 : vector<2x8x1xf32> to vector<2x8x32xf32>
    %212 = arith.subf %206, %211 : vector<2x8x32xf32>
    %213 = arith.mulf %202, %212 : vector<2x8x32xf32>
    %cst_61 = arith.constant dense<0.000000e+00> : vector<2x8xf32>
    %214 = vector.multi_reduction <add>, %213, %cst_61 [2] : vector<2x8x32xf32> to vector<2x8xf32>
    %215 = vector.shape_cast %214 : vector<2x8xf32> to vector<2x8x1xf32>
    %cst_62 = arith.constant 0.000000e+00 : f32
    %216 = vector.broadcast %cst_62 : f32 to vector<2x8x1xf32>
    %217 = arith.subf %216, %215 : vector<2x8x1xf32>
    %cst_63 = arith.constant dense<0.000000e+00> : vector<2x1xf32>
    %218 = vector.multi_reduction <add>, %217, %cst_63 [1] : vector<2x8x1xf32> to vector<2x1xf32>
    %cst_64 = arith.constant 1.250000e-01 : f32
    %219 = vector.broadcast %cst_64 : f32 to vector<2x1xf32>
    %220 = arith.mulf %218, %219 : vector<2x1xf32>
    %221 = vector.shape_cast %220 : vector<2x1xf32> to vector<2x1xf32>
    %222 = vector.broadcast %221 : vector<2x1xf32> to vector<2x128xf32>
    %c0_65 = arith.constant 0 : index
    %c0_66 = arith.constant 0 : index
    %c0_67 = arith.constant 0 : index
    %223 = vector.load %arg4[%c0_65, %c0_66, %c0_67] : memref<1x2x128xf32, #tpu.memory_space<vmem>>, vector<1x2x128xf32>
    %224 = vector.shape_cast %223 : vector<1x2x128xf32> to vector<2x128xf32>
    %225 = vector.shape_cast %222 : vector<2x128xf32> to vector<1x2x128xf32>
    tpu.vector_store %arg4[%c0_65, %c0_66, %c0_67], %225 {strides = array<i32>} : memref<1x2x128xf32, #tpu.memory_space<vmem>>, vector<1x2x128xf32>,
    return
  }
  func.func @transform_0(%arg0: i32) -> (i32, i32, i32) {
    %c0_i32 = arith.constant 0 : i32
    %c0_i32_0 = arith.constant 0 : i32
    %c0_i32_1 = arith.constant 0 : i32
    return %arg0, %c0_i32, %c0_i32_0 : i32, i32, i32
  }
  func.func @transform_1(%arg0: i32) -> (i32, i32, i32) {
    %c0_i32 = arith.constant 0 : i32
    %c0_i32_0 = arith.constant 0 : i32
    %c0_i32_1 = arith.constant 0 : i32
    return %arg0, %c0_i32, %c0_i32_0 : i32, i32, i32
  }
  func.func @transform_2(%arg0: i32) -> (i32, i32) {
    %c0_i32 = arith.constant 0 : i32
    %c0_i32_0 = arith.constant 0 : i32
    %c0_i32_1 = arith.constant 0 : i32
    return %c0_i32, %c0_i32_0 : i32, i32
  }
  func.func @transform_3(%arg0: i32) -> (i32, i32, i32) {
    %c0_i32 = arith.constant 0 : i32
    %c0_i32_0 = arith.constant 0 : i32
    %c0_i32_1 = arith.constant 0 : i32
    return %arg0, %c0_i32, %c0_i32_0 : i32, i32, i32
  }
}

</mosaic_0001>

<llo_original>
// kernel: tpu_custom_call.1
$region0: #{tpu_custom_call.1}
  #allocation0 [shape = 'u32[]', space=smem, size = 0x4, offset = 0x4, fixed_abs, tag = 'smem constant byte address 0x4 - core index']
  #allocation1 [shape = 'u32[144,128]{1,0:T(1,128)}', space=vmem, size = 0x12000, scoped, tag = 'internal scratch']
  %s0 = inlined_call_operand.hbm [shape: f32[4,8,128], index: 0, kind: input, shape index: {}]
  %s1 = inlined_call_operand.hbm [shape: f32[4,8,128], index: 1, kind: input, shape index: {}]
  %s2 = inlined_call_operand.hbm [shape: f32[216,128], index: 2, kind: input, shape index: {}]
  %s3 = inlined_call_operand.hbm [shape: f32[2,2,128], index: 3, kind: output, shape index: {}]
  %s4 = sld [smem:[#allocation0]]
  $region57: #{tpu_custom_call.1} parent=0
    _
  %s6 = ssub.s32 1, %s4
  %s7 = scalar_select 0, %s6, %s4
  $region1: #{tpu_custom_call.1} parent=0
    #allocation2 [shape = 'u8[16384]{0}', space=vmem, size = 0x4000, scoped, tag = 'input window, operand 0']
    #allocation3 [shape = 's32[2]{0}', space=sflag, size = 0x8, scoped, tag = 'scoped memory for tpu_custom_call.1']
    #allocation4 [shape = 's32[2]{0}', space=sflag, size = 0x8, scoped, tag = 'scoped memory for tpu_custom_call.1']
    #allocation5 [shape = 'u8[16384]{0}', space=vmem, size = 0x4000, scoped, tag = 'input window, operand 1']
    #allocation6 [shape = 's32[2]{0}', space=sflag, size = 0x8, scoped, tag = 'scoped memory for tpu_custom_call.1']
    #allocation7 [shape = 'u8[110592]{0}', space=vmem, size = 0x1b000, scoped, tag = 'input window, operand 2, single buffered']
    #allocation8 [shape = 'u8[2048]{0}', space=vmem, size = 0x800, scoped, tag = 'output window, operand 0']
    %8 = vsyncpa [#allocation3], 0
    %s9 = scalar_lea.sflag [#allocation3], 1
    %10 = vsyncpa %s9, 0
    %11 = vsyncpa [#allocation6], 0
    %s12 = scalar_lea.sflag [#allocation6], 1
    %13 = vsyncpa %s12, 0
    %14 = vsyncpa [#allocation4], 0
    %s15 = scalar_lea.sflag [#allocation4], 1
    %16 = vsyncpa %s15, 0
    loop: start=0, step=1, limit=4
    $region2: #{tpu_custom_call.1} parent=1 // loop_pre_header
      _
    $region3: #{tpu_custom_call.1} parent=1 // loop_header
      %s18 = sphi 0, %s22
      %p19 = scmp.ge.s32.totalorder %s18, 4
      %s28 = sphi 0, %s30
      %s31 = sphi 0, %s28
      %s32 = sphi 0, %s31
      %s48 = sphi 0, %s32
      %s54 = sphi 0, %s56
      %s57 = sphi 0, %s54
      %s58 = sphi 0, %s57
      %s74 = sphi 0, %s58
      %s78 = sphi 0, %s78
      %s80 = sphi 0, %s78
      %s81 = sphi 0, %s80
      %s95 = sphi 0, %s81
      %s101 = sphi 0, %s103
      %s104 = sphi 0, %s101
      %s105 = sphi 0, %s104
      %s121 = sphi 0, %s105
    $region4: #{tpu_custom_call.1} parent=1 // loop_header_branch
      %21 = sbr.rel (%p19) target = $region8
    $region5: #{tpu_custom_call.1} parent=1 // loop_body
      %s23 = ssub.s32 %s18, 1
      %s24 = ssub.s32 %s18, 2
      %s25 = sadd.s32 %s18, 1
      %s26 = ssub.s32 %s18, %s25
      %p27 = scmp.eq.s32.totalorder %s26, 0
      %s29 = sadd.s32 %s28, 1
      %s30 = scalar_select %p27, %s28, %s29
      %p33 = pneg %p27
      %p34 = scmp.eq.s32.totalorder %s18, 1
      %p35 = por %p33, %p34
      %p36 = scmp.ne.s32.totalorder %s28, %s31
      %p37 = scmp.eq.s32.totalorder %s18, 0
      %p38 = por %p36, %p37
      %p39 = scmp.ne.s32.totalorder %s28, %s31
      %p40 = scmp.eq.s32.totalorder %s23, 1
      %p41 = por %p39, %p40
      %p42 = scmp.ne.s32.totalorder %s31, %s32
      %p43 = scmp.eq.s32.totalorder %s23, 0
      %p44 = por %p42, %p43
      %p45 = scmp.ne.s32.totalorder %s31, %s32
      %p46 = scmp.eq.s32.totalorder %s24, 1
      %p47 = por %p45, %p46
      %p49 = scmp.ne.s32.totalorder %s32, %s48
      %p50 = scmp.eq.s32.totalorder %s24, 0
      %p51 = por %p49, %p50
      %s52 = ssub.s32 %s18, %s25
      %p53 = scmp.eq.s32.totalorder %s52, 0
      %s55 = sadd.s32 %s54, 1
      %s56 = scalar_select %p53, %s54, %s55
      %p59 = pneg %p53
      %p60 = scmp.eq.s32.totalorder %s18, 1
      %p61 = por %p59, %p60
      %p62 = scmp.ne.s32.totalorder %s54, %s57
      %p63 = scmp.eq.s32.totalorder %s18, 0
      %p64 = por %p62, %p63
      %p65 = scmp.ne.s32.totalorder %s54, %s57
      %p66 = scmp.eq.s32.totalorder %s23, 1
      %p67 = por %p65, %p66
      %p68 = scmp.ne.s32.totalorder %s57, %s58
      %p69 = scmp.eq.s32.totalorder %s23, 0
      %p70 = por %p68, %p69
      %p71 = scmp.ne.s32.totalorder %s57, %s58
      %p72 = scmp.eq.s32.totalorder %s24, 1
      %p73 = por %p71, %p72
      %p75 = scmp.ne.s32.totalorder %s58, %s74
      %p76 = scmp.eq.s32.totalorder %s24, 0
      %p77 = por %p75, %p76
      %s79 = sadd.s32 %s78, 1
      %p82 = scmp.eq.s32.totalorder %s18, 1
      %p83 = scmp.ne.s32.totalorder %s78, %s80
      %p84 = scmp.eq.s32.totalorder %s18, 0
      %p85 = por %p83, %p84
      %p86 = scmp.ne.s32.totalorder %s78, %s80
      %p87 = scmp.eq.s32.totalorder %s23, 1
      %p88 = por %p86, %p87
      %p89 = scmp.ne.s32.totalorder %s80, %s81
      %p90 = scmp.eq.s32.totalorder %s23, 0
      %p91 = por %p89, %p90
      %p92 = scmp.ne.s32.totalorder %s80, %s81
      %p93 = scmp.eq.s32.totalorder %s24, 1
      %p94 = por %p92, %p93
      %p96 = scmp.ne.s32.totalorder %s81, %s95
      %p97 = scmp.eq.s32.totalorder %s24, 0
      %p98 = por %p96, %p97
      %s99 = ssub.s32 %s18, %s25
      %p100 = scmp.eq.s32.totalorder %s99, 0
      %s102 = sadd.s32 %s101, 1
      %s103 = scalar_select %p100, %s101, %s102
      %p106 = pneg %p100
      %p107 = scmp.eq.s32.totalorder %s18, 1
      %p108 = por %p106, %p107
      %p109 = scmp.ne.s32.totalorder %s101, %s104
      %p110 = scmp.eq.s32.totalorder %s18, 0
      %p111 = por %p109, %p110
      %p112 = scmp.ne.s32.totalorder %s101, %s104
      %p113 = scmp.eq.s32.totalorder %s23, 1
      %p114 = por %p112, %p113
      %p115 = scmp.ne.s32.totalorder %s104, %s105
      %p116 = scmp.eq.s32.totalorder %s23, 0
      %p117 = por %p115, %p116
      %p118 = scmp.ne.s32.totalorder %s104, %s105
      %p119 = scmp.eq.s32.totalorder %s24, 1
      %p120 = por %p118, %p119
      %p122 = scmp.ne.s32.totalorder %s105, %s121
      %p123 = scmp.eq.s32.totalorder %s24, 0
      %p124 = por %p122, %p123
      %p125 = scmp.le.s32.totalorder 1, %s18
      %p126 = scmp.lt.s32.totalorder %s18, 3
      %p127 = pnand %p125, %p126
      %p128 = pneg %p127
      // Predicated region
      $region9: #{tpu_custom_call.1} parent=5 // pred_check
        _
      $region10: #{tpu_custom_call.1} parent=5 // pred_check_branch
        %130 = sbr.rel (%p127) target = $region12
      $region11: #{tpu_custom_call.1} parent=5 // pred_region
        %s131 = ssub.s32 %s18, 1
        // Predicated region
        $region13: #{tpu_custom_call.1} parent=11 // pred_check
          %p132 = pneg %p91
        $region14: #{tpu_custom_call.1} parent=11 // pred_check_branch
          %134 = sbr.rel (%p132) target = $region16
        $region15: #{tpu_custom_call.1} parent=11 // pred_region
          %s136 = ssub.s32 3456, 3456
          %137 = vsyncadd [#allocation6], %s136
          %s138 = sshll.u32 [#allocation7], 4
          %s139 = int_to_ptr.vmem [resolvable:$true] %s138
          %144 = dma.hbm_to_vmem [thread:$0]  %s2, 3456, %s139, [#allocation6], 128, 128, 8
        $region16: #{tpu_custom_call.1} parent=11 // pred_fallthru
          _
      $region12: #{tpu_custom_call.1} parent=5 // pred_fallthru
        _
      %p145 = scmp.lt.s32.totalorder %s18, 2
      // Predicated region
      $region17: #{tpu_custom_call.1} parent=5 // pred_check
        %p146 = pneg %p145
      $region18: #{tpu_custom_call.1} parent=5 // pred_check_branch
        %148 = sbr.rel (%p146) target = $region20
      $region19: #{tpu_custom_call.1} parent=5 // pred_region
        // Predicated region
        $region21: #{tpu_custom_call.1} parent=19 // pred_check
          %p149 = pneg %p38
        $region22: #{tpu_custom_call.1} parent=19 // pred_check_branch
          %151 = sbr.rel (%p149) target = $region24
        $region23: #{tpu_custom_call.1} parent=19 // pred_region
          %s152 = sand.u32 %s28, 1
          %s153 = scalar_lea.sflag [#allocation3], %s152
          %s154 = sand.u32 %s28, 1
          %s155 = smul.addr %s154, 16
          %s156 = scalar_lea.vmem [#allocation2], %s155
          %s157 = smul.u32 2, %s18
          %s159 = ssub.s32 256, 256
          %160 = vsyncadd %s153, %s159
          %s161 = smul.addr %s157, 128
          %s162 = scalar_lea.hbm %s0, %s161
          %s163 = sshll.u32 %s156, 4
          %s164 = int_to_ptr.vmem [resolvable:$true] %s163
          %169 = dma.hbm_to_vmem [thread:$0]  %s162, 256, %s164, %s153, 128, 128, 8
        $region24: #{tpu_custom_call.1} parent=19 // pred_fallthru
          _
        // Predicated region
        $region25: #{tpu_custom_call.1} parent=19 // pred_check
          %p170 = pneg %p64
        $region26: #{tpu_custom_call.1} parent=19 // pred_check_branch
          %172 = sbr.rel (%p170) target = $region28
        $region27: #{tpu_custom_call.1} parent=19 // pred_region
          %s173 = sand.u32 %s18, 1
          %s174 = scalar_lea.sflag [#allocation6], %s173
          %s175 = sand.u32 %s54, 1
          %s176 = smul.addr %s175, 16
          %s177 = scalar_lea.vmem [#allocation5], %s176
          %s178 = smul.u32 2, %s18
          %s180 = ssub.s32 256, 256
          %181 = vsyncadd %s174, %s180
          %s182 = smul.addr %s178, 128
          %s183 = scalar_lea.hbm %s1, %s182
          %s184 = sshll.u32 %s177, 4
          %s185 = int_to_ptr.vmem [resolvable:$true] %s184
          %190 = dma.hbm_to_vmem [thread:$0]  %s183, 256, %s185, %s174, 128, 128, 8
        $region28: #{tpu_custom_call.1} parent=19 // pred_fallthru
          _
      $region20: #{tpu_custom_call.1} parent=5 // pred_fallthru
        _
      %p191 = scmp.le.s32.totalorder 1, %s18
      %p192 = scmp.lt.s32.totalorder %s18, 3
      %p193 = pnand %p191, %p192
      %p194 = pneg %p193
      // Predicated region
      $region29: #{tpu_custom_call.1} parent=5 // pred_check
        _
      $region30: #{tpu_custom_call.1} parent=5 // pred_check_branch
        %196 = sbr.rel (%p193) target = $region32
      $region31: #{tpu_custom_call.1} parent=5 // pred_region
        %s197 = ssub.s32 %s18, 1
        %s198 = sand.u32 %s31, 1
        %s199 = scalar_lea.sflag [#allocation3], %s198
        %s200 = sand.u32 %s31, 1
        %s201 = smul.addr %s200, 16
        %s202 = scalar_lea.vmem [#allocation2], %s201
        // Predicated region
        $region33: #{tpu_custom_call.1} parent=31 // pred_check
          %p203 = pneg %p44
        $region34: #{tpu_custom_call.1} parent=31 // pred_check_branch
          %205 = sbr.rel (%p203) target = $region36
        $region35: #{tpu_custom_call.1} parent=31 // pred_region
          %206 = dma.done %s199, 256
        $region36: #{tpu_custom_call.1} parent=31 // pred_fallthru
          _
        %s207 = sand.u32 %s23, 1
        %s208 = scalar_lea.sflag [#allocation6], %s207
        %s209 = sand.u32 %s57, 1
        %s210 = smul.addr %s209, 16
        %s211 = scalar_lea.vmem [#allocation5], %s210
        // Predicated region
        $region37: #{tpu_custom_call.1} parent=31 // pred_check
          %p212 = pneg %p70
        $region38: #{tpu_custom_call.1} parent=31 // pred_check_branch
          %214 = sbr.rel (%p212) target = $region40
        $region39: #{tpu_custom_call.1} parent=31 // pred_region
          %215 = dma.done %s208, 256
        $region40: #{tpu_custom_call.1} parent=31 // pred_fallthru
          _
        // Predicated region
        $region41: #{tpu_custom_call.1} parent=31 // pred_check
          %p216 = pneg %p91
        $region42: #{tpu_custom_call.1} parent=31 // pred_check_branch
          %218 = sbr.rel (%p216) target = $region44
        $region43: #{tpu_custom_call.1} parent=31 // pred_region
          %219 = dma.done [#allocation6], 3456
        $region44: #{tpu_custom_call.1} parent=31 // pred_fallthru
          _
        %s220 = sand.u32 %s31, 1
        %s221 = scalar_lea.sflag [#allocation3], %s220
        %s222 = sand.u32 %s31, 1
        %s223 = smul.addr %s222, 16
        %s224 = scalar_lea.vmem [#allocation2], %s223
        %p225 = pneg %p44
        %p226 = pneg %p41
        %s227 = sand.u32 %s23, 1
        %s228 = scalar_lea.sflag [#allocation6], %s227
        %s229 = sand.u32 %s57, 1
        %s230 = smul.addr %s229, 16
        %s231 = scalar_lea.vmem [#allocation5], %s230
        %p232 = pneg %p70
        %p233 = pneg %p67
        %p234 = pneg %p91
        %p235 = pneg %p88
        %p236 = pneg %p117
        %p237 = pneg %p114
        %s238 = sand.u32 %s104, 1
        %s239 = scalar_lea.sflag [#allocation4], %s238
        %s240 = sand.u32 %s104, 1
        %s241 = smul.addr %s240, 2
        %s242 = scalar_lea.vmem [#allocation8], %s241
        %s243 = smul.u32 2, %s23
        %s244 = smul.u32 2, %s23
        %v246 = vld [vmem:[%s202] sm:$0xff]
        %v247 = vld [vmem:[%s202 + $0x8] sm:$0xff]
        %v248 = vld [vmem:[%s211] sm:$0xff]
        %v249 = vld [vmem:[%s211 + $0x8] sm:$0xff]
        %v250 = vld [vmem:[#allocation7] sm:$0xff]
        %v251 = vld [vmem:[#allocation7 + $0x8] sm:$0xff]
        %v252 = vld [vmem:[#allocation7 + $0x10] sm:$0xff]
        %v253 = vld [vmem:[#allocation7 + $0x18] sm:$0xff]
        %v254 = vld [vmem:[#allocation7 + $0x20] sm:$0xff]
        %v255 = vld [vmem:[#allocation7 + $0x28] sm:$0xff]
        %v256 = vld [vmem:[#allocation7 + $0x30] sm:$0xff]
        %v257 = vld [vmem:[#allocation7 + $0x38] sm:$0xff]
        %v258 = vld [vmem:[#allocation7 + $0x40] sm:$0xff]
        %v259 = vld [vmem:[#allocation7 + $0x48] sm:$0xff]
        %v260 = vld [vmem:[#allocation7 + $0x50] sm:$0xff]
        %v261 = vld [vmem:[#allocation7 + $0x58] sm:$0xff]
        %v262 = vld [vmem:[#allocation7 + $0x60] sm:$0xff]
        %v263 = vld [vmem:[#allocation7 + $0x68] sm:$0xff]
        %v264 = vld [vmem:[#allocation7 + $0x70] sm:$0xff]
        %v265 = vld [vmem:[#allocation7 + $0x78] sm:$0xff]
        %v266 = vld [vmem:[#allocation7 + $0x80] sm:$0x1]
        %v267 = vld [vmem:[#allocation7 + $0x88] sm:$0xff]
        %v268 = vld [vmem:[#allocation7 + $0x90] sm:$0xff]
        %v269 = vld [vmem:[#allocation7 + $0x98] sm:$0xff]
        %v270 = vld [vmem:[#allocation7 + $0xa0] sm:$0xff]
        %v271 = vld [vmem:[#allocation7 + $0xa8] sm:$0x1]
        %v272 = vld [vmem:[#allocation7 + $0xb0] sm:$0xff]
        %v273 = vld [vmem:[#allocation7 + $0xb8] sm:$0xff]
        %v274 = vld [vmem:[#allocation7 + $0xc0] sm:$0xff]
        %v275 = vld [vmem:[#allocation7 + $0xc8] sm:$0xff]
        %v276 = vld [vmem:[#allocation7 + $0xd0] sm:$0x1]
        %vm277 = vcmp.eq.f32.partialorder %v246, 1.0
        %vm278 = vcmp.eq.f32.partialorder %v247, 1.0
        %v279 = vsel %vm277, 1, 0
        %v280 = vsel %vm278, 1, 0
        %v281 = vcvt.s32.f32 %v279
        %v282 = vcvt.s32.f32 %v280
        %vm283 = vcmp.eq.f32.partialorder %v246, 0.0
        %vm284 = vcmp.eq.f32.partialorder %v247, 0.0
        %v285 = vsel %vm283, 1, 0
        %v286 = vsel %vm284, 1, 0
        %v287 = vcvt.s32.f32 %v285
        %v288 = vcvt.s32.f32 %v286
        %vm289 = vcmask 7168
        %v290 = vsel %vm289, %v281, 0.0
        %v291 = vrot.slane %v290, 4
        %v292 = vadd.f32 %v290, %v291
        %v293 = vrot.slane %v292, 2
        %v294 = vadd.f32 %v292, %v293
        %v295 = vrot.slane %v294, 1
        %v296 = vadd.f32 %v294, %v295
        %v297 = vsel %vm289, %v282, 0.0
        %v298 = vrot.slane %v297, 4
        %v299 = vadd.f32 %v297, %v298
        %v300 = vrot.slane %v299, 2
        %v301 = vadd.f32 %v299, %v300
        %v302 = vrot.slane %v301, 1
        %v303 = vadd.f32 %v301, %v302
        %v304 = vsel %vm289, %v287, 0.0
        %v305 = vrot.slane %v304, 4
        %v306 = vadd.f32 %v304, %v305
        %v307 = vrot.slane %v306, 2
        %v308 = vadd.f32 %v306, %v307
        %v309 = vrot.slane %v308, 1
        %v310 = vadd.f32 %v308, %v309
        %v311 = vsel %vm289, %v288, 0.0
        %v312 = vrot.slane %v311, 4
        %v313 = vadd.f32 %v311, %v312
        %v314 = vrot.slane %v313, 2
        %v315 = vadd.f32 %v313, %v314
        %v316 = vrot.slane %v315, 1
        %v317 = vadd.f32 %v315, %v316
        %v318 = vmax.f32 %v296, 1.0
        %v319 = vmax.f32 %v303, 1.0
        %v320 = vmax.f32 %v310, 1.0
        %v321 = vmax.f32 %v317, 1.0
        %324 = vrot.lane.b32.xlu0 %v281, 125
        %v325 = vpop.permute.xlu0 %324
        %326 = vrot.lane.b32.xlu0 %v282, 125
        %v327 = vpop.permute.xlu0 %326
        %v330 = vmul.f32 %v246, %v325
        %v331 = vmul.f32 %v247, %v327
        %vm332 = vcmask 1032168
        %v333 = vsel %vm332, %v330, 0.0
        %v334 = vrot.slane %v333, 4
        %v335 = vadd.f32 %v333, %v334
        %v336 = vrot.slane %v335, 2
        %v337 = vadd.f32 %v335, %v336
        %v338 = vrot.slane %v337, 1
        %v339 = vadd.f32 %v337, %v338
        %v340 = vsel %vm332, %v331, 0.0
        %v341 = vrot.slane %v340, 4
        %v342 = vadd.f32 %v340, %v341
        %v343 = vrot.slane %v342, 2
        %v344 = vadd.f32 %v342, %v343
        %v345 = vrot.slane %v344, 1
        %v346 = vadd.f32 %v344, %v345
        %349 = vrot.lane.b32.xlu0 %v318, 125
        %v350 = vpop.permute.xlu0 %349
        %351 = vrot.lane.b32.xlu0 %v319, 125
        %v352 = vpop.permute.xlu0 %351
        %v355 = vrcp.pop %v350
        %v356 = vmul.f32 %v339, %v355
        %v357 = vrcp.pop %v352
        %v358 = vmul.f32 %v346, %v357
        %361 = vrot.lane.b32.xlu0 %v287, 125
        %v362 = vpop.permute.xlu0 %361
        %363 = vrot.lane.b32.xlu0 %v288, 125
        %v364 = vpop.permute.xlu0 %363
        %v367 = vmul.f32 %v246, %v362
        %v368 = vmul.f32 %v247, %v364
        %v369 = vsel %vm332, %v367, 0.0
        %v370 = vrot.slane %v369, 4
        %v371 = vadd.f32 %v369, %v370
        %v372 = vrot.slane %v371, 2
        %v373 = vadd.f32 %v371, %v372
        %v374 = vrot.slane %v373, 1
        %v375 = vadd.f32 %v373, %v374
        %v376 = vsel %vm332, %v368, 0.0
        %v377 = vrot.slane %v376, 4
        %v378 = vadd.f32 %v376, %v377
        %v379 = vrot.slane %v378, 2
        %v380 = vadd.f32 %v378, %v379
        %v381 = vrot.slane %v380, 1
        %v382 = vadd.f32 %v380, %v381
        %385 = vrot.lane.b32.xlu0 %v320, 125
        %v386 = vpop.permute.xlu0 %385
        %387 = vrot.lane.b32.xlu0 %v321, 125
        %v388 = vpop.permute.xlu0 %387
        %v391 = vrcp.pop %v386
        %v392 = vmul.f32 %v375, %v391
        %v393 = vrcp.pop %v388
        %v394 = vmul.f32 %v382, %v393
        %v395 = vlaneseq
        %v396 = vshrl.u32 %v395, 7
        %v397 = vsub.s32 0, %v396
        %v398 = vrot.slane %v356, %v397
        %v399 = vlaneseq
        %v400 = vshrl.u32 %v399, 7
        %v401 = vsub.s32 0, %v400
        %v402 = vrot.slane %v358, %v401
        %v403 = vsub.f32 %v246, %v398
        %v404 = vsub.f32 %v247, %v402
        %v405 = vmul.f32 %v403, %v403
        %v406 = vmul.f32 %v404, %v404
        %v407 = vmul.f32 %v405, %v325
        %v408 = vmul.f32 %v406, %v327
        %v409 = vsel %vm332, %v407, 0.0
        %v410 = vrot.slane %v409, 4
        %v411 = vadd.f32 %v409, %v410
        %v412 = vrot.slane %v411, 2
        %v413 = vadd.f32 %v411, %v412
        %v414 = vrot.slane %v413, 1
        %v415 = vadd.f32 %v413, %v414
        %v416 = vsel %vm332, %v408, 0.0
        %v417 = vrot.slane %v416, 4
        %v418 = vadd.f32 %v416, %v417
        %v419 = vrot.slane %v418, 2
        %v420 = vadd.f32 %v418, %v419
        %v421 = vrot.slane %v420, 1
        %v422 = vadd.f32 %v420, %v421
        %v423 = vmul.f32 %v415, %v355
        %v424 = vmul.f32 %v422, %v357
        %v425 = vlaneseq
        %v426 = vshrl.u32 %v425, 7
        %v427 = vsub.s32 0, %v426
        %v428 = vrot.slane %v392, %v427
        %v429 = vlaneseq
        %v430 = vshrl.u32 %v429, 7
        %v431 = vsub.s32 0, %v430
        %v432 = vrot.slane %v394, %v431
        %v433 = vsub.f32 %v246, %v428
        %v434 = vsub.f32 %v247, %v432
        %v435 = vmul.f32 %v433, %v433
        %v436 = vmul.f32 %v434, %v434
        %v437 = vmul.f32 %v435, %v362
        %v438 = vmul.f32 %v436, %v364
        %v439 = vsel %vm332, %v437, 0.0
        %v440 = vrot.slane %v439, 4
        %v441 = vadd.f32 %v439, %v440
        %v442 = vrot.slane %v441, 2
        %v443 = vadd.f32 %v441, %v442
        %v444 = vrot.slane %v443, 1
        %v445 = vadd.f32 %v443, %v444
        %v446 = vsel %vm332, %v438, 0.0
        %v447 = vrot.slane %v446, 4
        %v448 = vadd.f32 %v446, %v447
        %v449 = vrot.slane %v448, 2
        %v450 = vadd.f32 %v448, %v449
        %v451 = vrot.slane %v450, 1
        %v452 = vadd.f32 %v450, %v451
        %v453 = vmul.f32 %v445, %v391
        %v454 = vmul.f32 %v452, %v393
        %v455 = vrsqrt.pop %v423
        %v456 = vmul.f32 %v423, %v455
        %vm457 = vcmp.eq.f32.partialorder %v423, inf
        %v458 = vsel %vm457, %v423, %v456
        %vm459 = vcmp.eq.f32.partialorder %v423, 0.0
        %v460 = vand.u32 %v423, 2147483648
        %v461 = vsel %vm459, %v460, %v458
        %v462 = vrsqrt.pop %v424
        %v463 = vmul.f32 %v424, %v462
        %vm464 = vcmp.eq.f32.partialorder %v424, inf
        %v465 = vsel %vm464, %v424, %v463
        %vm466 = vcmp.eq.f32.partialorder %v424, 0.0
        %v467 = vand.u32 %v424, 2147483648
        %v468 = vsel %vm466, %v467, %v465
        %v469 = vadd.f32 %v461, 1e-20
        %v470 = vadd.f32 %v468, 1e-20
        %v471 = vrsqrt.pop %v453
        %v472 = vmul.f32 %v453, %v471
        %vm473 = vcmp.eq.f32.partialorder %v453, inf
        %v474 = vsel %vm473, %v453, %v472
        %vm475 = vcmp.eq.f32.partialorder %v453, 0.0
        %v476 = vand.u32 %v453, 2147483648
        %v477 = vsel %vm475, %v476, %v474
        %v478 = vrsqrt.pop %v454
        %v479 = vmul.f32 %v454, %v478
        %vm480 = vcmp.eq.f32.partialorder %v454, inf
        %v481 = vsel %vm480, %v454, %v479
        %vm482 = vcmp.eq.f32.partialorder %v454, 0.0
        %v483 = vand.u32 %v454, 2147483648
        %v484 = vsel %vm482, %v483, %v481
        %v485 = vadd.f32 %v477, 1e-20
        %v486 = vadd.f32 %v484, 1e-20
        %vm487 = vcmp.gt.f32.partialorder %v310, 0.0
        %vm488 = vcmp.gt.f32.partialorder %v317, 0.0
        %491 = vrot.lane.b32.xlu0 %v485, 3
        %v492 = vpop.permute.xlu0 %491
        %493 = vrot.lane.b32.xlu0 %v486, 3
        %v494 = vpop.permute.xlu0 %493
        %499 = vrot.lane.b32.xlu0 %v469, 3
        %v500 = vpop.permute.xlu0 %499
        %501 = vrot.lane.b32.xlu0 %v470, 3
        %v502 = vpop.permute.xlu0 %501
        %v505 = vsel %vm487, %v492, %v500
        %v506 = vsel %vm488, %v494, %v502
        %vm507 = vcmp.gt.f32.partialorder %v296, 0.0
        %vm508 = vcmp.gt.f32.partialorder %v303, 0.0
        %v509 = vsel %vm507, %v500, %v492
        %v510 = vsel %vm508, %v502, %v494
        %513 = vrot.lane.b32.xlu0 %v392, 3
        %v514 = vpop.permute.xlu0 %513
        %515 = vrot.lane.b32.xlu0 %v394, 3
        %v516 = vpop.permute.xlu0 %515
        %521 = vrot.lane.b32.xlu0 %v356, 3
        %v522 = vpop.permute.xlu0 %521
        %523 = vrot.lane.b32.xlu0 %v358, 3
        %v524 = vpop.permute.xlu0 %523
        %v527 = vsel %vm487, %v514, %v522
        %v528 = vsel %vm488, %v516, %v524
        %v529 = vsel %vm507, %v522, %v514
        %v530 = vsel %vm508, %v524, %v516
        %v531 = vrcp.pop %v505
        %v532 = vmul.f32 1.0, %v531
        %v533 = vrcp.pop %v506
        %v534 = vmul.f32 1.0, %v533
        %v535 = vrcp.pop %v509
        %v536 = vmul.f32 1.0, %v535
        %v537 = vrcp.pop %v510
        %v538 = vmul.f32 1.0, %v537
        %v539 = vlaneseq
        %v540 = vshrl.u32 %v539, 7
        %v541 = vsub.s32 0, %v540
        %v542 = vrot.slane %v529, %v541
        %v543 = vlaneseq
        %v544 = vshrl.u32 %v543, 7
        %v545 = vsub.s32 0, %v544
        %v546 = vrot.slane %v530, %v545
        %549 = vrot.lane.b32.xlu0 %v542, 125
        %v550 = vpop.permute.xlu0 %549
        %551 = vrot.lane.b32.xlu0 %v546, 125
        %v552 = vpop.permute.xlu0 %551
        %v555 = vsub.f32 %v246, %v550
        %v556 = vsub.f32 %v247, %v552
        %v557 = vlaneseq
        %v558 = vshrl.u32 %v557, 7
        %v559 = vsub.s32 0, %v558
        %v560 = vrot.slane %v536, %v559
        %v561 = vlaneseq
        %v562 = vshrl.u32 %v561, 7
        %v563 = vsub.s32 0, %v562
        %v564 = vrot.slane %v538, %v563
        %567 = vrot.lane.b32.xlu0 %v560, 125
        %v568 = vpop.permute.xlu0 %567
        %569 = vrot.lane.b32.xlu0 %v564, 125
        %v570 = vpop.permute.xlu0 %569
        %v573 = vmul.f32 %v555, %v568
        %v574 = vmul.f32 %v556, %v570
        %v575 = vlaneseq
        %v576 = vshrl.u32 %v575, 7
        %v577 = vsub.s32 0, %v576
        %v578 = vrot.slane %v527, %v577
        %v579 = vlaneseq
        %v580 = vshrl.u32 %v579, 7
        %v581 = vsub.s32 0, %v580
        %v582 = vrot.slane %v528, %v581
        %585 = vrot.lane.b32.xlu0 %v578, 125
        %v586 = vpop.permute.xlu0 %585
        %587 = vrot.lane.b32.xlu0 %v582, 125
        %v588 = vpop.permute.xlu0 %587
        %v591 = vsub.f32 %v246, %v586
        %v592 = vsub.f32 %v247, %v588
        %v593 = vlaneseq
        %v594 = vshrl.u32 %v593, 7
        %v595 = vsub.s32 0, %v594
        %v596 = vrot.slane %v532, %v595
        %v597 = vlaneseq
        %v598 = vshrl.u32 %v597, 7
        %v599 = vsub.s32 0, %v598
        %v600 = vrot.slane %v534, %v599
        %603 = vrot.lane.b32.xlu0 %v596, 125
        %v604 = vpop.permute.xlu0 %603
        %605 = vrot.lane.b32.xlu0 %v600, 125
        %v606 = vpop.permute.xlu0 %605
        %v609 = vmul.f32 %v591, %v604
        %v610 = vmul.f32 %v592, %v606
        %613 = vrot.lane.b32.xlu0 %v573, 3
        %v614 = vpop.permute.xlu0 %613
        %615 = vrot.lane.b32.xlu0 %v574, 3
        %v616 = vpop.permute.xlu0 %615
        %621 = vrot.lane.b32.xlu0 %v609, 3
        %v622 = vpop.permute.xlu0 %621
        %623 = vrot.lane.b32.xlu0 %v610, 3
        %v624 = vpop.permute.xlu0 %623
        %v627 = vsel %vm277, %v614, %v622
        %v628 = vsel %vm278, %v616, %v624
        %vm629 = vcmp.eq.f32.partialorder %v248, 0.0
        %vm630 = vcmp.eq.f32.partialorder %v249, 0.0
        %631 = vrot.lane.b32.xlu0 %v578, 126
        %v632 = vpop.permute.xlu0 %631
        %633 = vrot.lane.b32.xlu0 %v582, 126
        %v634 = vpop.permute.xlu0 %633
        %v637 = vsub.f32 %v248, %v632
        %v638 = vsub.f32 %v249, %v634
        %639 = vrot.lane.b32.xlu0 %v596, 126
        %v640 = vpop.permute.xlu0 %639
        %641 = vrot.lane.b32.xlu0 %v600, 126
        %v642 = vpop.permute.xlu0 %641
        %v645 = vmul.f32 %v637, %v640
        %v646 = vmul.f32 %v638, %v642
        %647 = vrot.lane.b32.xlu0 %v542, 127
        %v648 = vpop.permute.xlu0 %647
        %649 = vrot.lane.b32.xlu0 %v546, 127
        %v650 = vpop.permute.xlu0 %649
        %v653 = vsub.f32 %v248, %v648
        %v654 = vsub.f32 %v249, %v650
        %655 = vrot.lane.b32.xlu0 %v560, 127
        %v656 = vpop.permute.xlu0 %655
        %657 = vrot.lane.b32.xlu0 %v564, 127
        %v658 = vpop.permute.xlu0 %657
        %v661 = vmul.f32 %v653, %v656
        %v662 = vmul.f32 %v654, %v658
        %665 = vrot.lane.b32.xlu0 %v645, 2
        %v666 = vpop.permute.xlu0 %665
        %667 = vrot.lane.b32.xlu0 %v646, 2
        %v668 = vpop.permute.xlu0 %667
        %673 = vrot.lane.b32.xlu0 %v661, 1
        %v674 = vpop.permute.xlu0 %673
        %675 = vrot.lane.b32.xlu0 %v662, 1
        %v676 = vpop.permute.xlu0 %675
        %v679 = vsel %vm629, %v666, %v674
        %v680 = vsel %vm630, %v668, %v676
        %v681 = vpack.c.bf16 %v251, %v250
        %v682 = vpack.c.bf16 %v253, %v252
        %v683 = vpack.c.bf16 %v255, %v254
        %v684 = vpack.c.bf16 %v257, %v256
        %v685 = vpack.c.bf16 %v259, %v258
        %v686 = vpack.c.bf16 %v261, %v260
        %v687 = vpack.c.bf16 %v263, %v262
        %v688 = vpack.c.bf16 %v265, %v264
        %v689 = vpack.c.bf16 %v247, %v246
        %691 = vset.pattern.permute.xlu0 0
        %692 = vperm.xlu0 %691, %v627
        %v693 = vpop.permute.xlu0 %692
        %696 = vset.pattern.permute.xlu0 0
        %697 = vperm.xlu0 %696, %v628
        %v698 = vpop.permute.xlu0 %697
        %v700 = vlaneseq
        %v701 = vshrl.u32 %v700, 7
        %v702 = vsub.s32 0, %v701
        %v703 = vrot.slane %v266, %v702
        %v704 = vmul.f32 %v693, %v703
        %v705 = vmul.f32 %v698, %v703
        %706 = vmatprep.subr.bf16.mxu0 0
        %707 = vmatpush1.bf16.msra.mxu0 %v681
        %708 = vmatprep.subr.bf16.mxu0 0
        %709 = vmatpush1.bf16.msra.mxu0 %v682
        %710 = vmatprep.subr.bf16.mxu0 0
        %711 = vmatpush1.bf16.msra.mxu0 %v683
        %712 = vmatprep.subr.bf16.mxu0 0
        %713 = vmatpush1.bf16.msra.mxu0 %v684
        %714 = vmatprep.subr.bf16.mxu0 0
        %715 = vmatpush1.bf16.msra.mxu0 %v685
        %716 = vmatprep.subr.bf16.mxu0 0
        %717 = vmatpush1.bf16.msra.mxu0 %v686
        %718 = vmatprep.subr.bf16.mxu0 0
        %719 = vmatpush1.bf16.msra.mxu0 %v687
        %720 = vmatprep.subr.bf16.mxu0 0
        %721 = vmatpush1.bf16.msra.mxu0 %v688
        %722 = vmatprep.subr.bf16.mxu0 0
        %723 = vmatpush1.bf16.msra.mxu0 0
        %724 = vmatprep.subr.bf16.mxu0 0
        %725 = vmatpush1.bf16.msra.mxu0 0
        %726 = vmatprep.subr.bf16.mxu0 0
        %727 = vmatpush1.bf16.msra.mxu0 0
        %728 = vmatprep.subr.bf16.mxu0 0
        %729 = vmatpush1.bf16.msra.mxu0 0
        %730 = vmatprep.subr.bf16.mxu0 0
        %731 = vmatpush1.bf16.msra.mxu0 0
        %732 = vmatprep.subr.bf16.mxu0 0
        %733 = vmatpush1.bf16.msra.mxu0 0
        %734 = vmatprep.subr.bf16.mxu0 0
        %735 = vmatpush1.bf16.msra.mxu0 0
        %736 = vmatprep.subr.bf16.mxu0 0
        %737 = vmatpush1.bf16.msra.mxu0 0
        %738 = vmatprep.mubr.bf16.mxu0 0
        %739 = vmatmul.mubr.bf16.gmra.mrb[0].mxu0 %v689
        %v740 = vpop.f32.mrb[0].mxu0
        %v741 = vadd.f32 %v704, %v740
        %v742 = vpop.f32.mrb[0].mxu0
        %v743 = vpop.f32.mrb[0].mxu0
        %v744 = vadd.f32 %v705, %v743
        %v745 = vpop.f32.mrb[0].mxu0
        %746 = vdwg.mxu0
        %v747 = vpack.c.bf16 %v249, %v248
        %748 = vmatprep.subr.bf16.mxu0 0
        %749 = vmatpush1.bf16.msra.mxu0 %v681
        %750 = vmatprep.subr.bf16.mxu0 0
        %751 = vmatpush1.bf16.msra.mxu0 %v682
        %752 = vmatprep.subr.bf16.mxu0 0
        %753 = vmatpush1.bf16.msra.mxu0 %v683
        %754 = vmatprep.subr.bf16.mxu0 0
        %755 = vmatpush1.bf16.msra.mxu0 %v684
        %756 = vmatprep.subr.bf16.mxu0 0
        %757 = vmatpush1.bf16.msra.mxu0 %v685
        %758 = vmatprep.subr.bf16.mxu0 0
        %759 = vmatpush1.bf16.msra.mxu0 %v686
        %760 = vmatprep.subr.bf16.mxu0 0
        %761 = vmatpush1.bf16.msra.mxu0 %v687
        %762 = vmatprep.subr.bf16.mxu0 0
        %763 = vmatpush1.bf16.msra.mxu0 %v688
        %764 = vmatprep.subr.bf16.mxu0 0
        %765 = vmatpush1.bf16.msra.mxu0 0
        %766 = vmatprep.subr.bf16.mxu0 0
        %767 = vmatpush1.bf16.msra.mxu0 0
        %768 = vmatprep.subr.bf16.mxu0 0
        %769 = vmatpush1.bf16.msra.mxu0 0
        %770 = vmatprep.subr.bf16.mxu0 0
        %771 = vmatpush1.bf16.msra.mxu0 0
        %772 = vmatprep.subr.bf16.mxu0 0
        %773 = vmatpush1.bf16.msra.mxu0 0
        %774 = vmatprep.subr.bf16.mxu0 0
        %775 = vmatpush1.bf16.msra.mxu0 0
        %776 = vmatprep.subr.bf16.mxu0 0
        %777 = vmatpush1.bf16.msra.mxu0 0
        %778 = vmatprep.subr.bf16.mxu0 0
        %779 = vmatpush1.bf16.msra.mxu0 0
        %780 = vmatprep.mubr.bf16.mxu0 0
        %781 = vmatmul.mubr.bf16.gmra.mrb[0].mxu0 %v747
        %v782 = vpop.f32.mrb[0].mxu0
        %v783 = vadd.f32 0.0, %v782
        %v784 = vpop.f32.mrb[0].mxu0
        %v785 = vpop.f32.mrb[0].mxu0
        %v786 = vadd.f32 0.0, %v785
        %v787 = vpop.f32.mrb[0].mxu0
        %788 = vdwg.mxu0
        %v789 = vpack.c.bf16 %v783, %v783
        %v790 = vpack.c.bf16 %v786, %v786
        %v791 = vpack.c.bf16 %v741, %v741
        %v792 = vpack.c.bf16 %v744, %v744
        %794 = vrot.lane.b32.xlu0 %v791, 96
        %v795 = vpop.permute.xlu0 %794
        %vm796 = vcmask 261120
        %v798 = vsel %vm796, %v789, 0
        %v801 = vsel %vm796, %v795, 0
        %803 = vmatprep.subr.bf16.mxu0 0
        %804 = vmatpush1.bf16.xpose.msra.mxu0 %v801
        %805 = vmatprep.subr.bf16.mxu0 0
        %806 = vmatpush1.bf16.xpose.msra.mxu0 0
        %807 = vmatprep.subr.bf16.mxu0 0
        %808 = vmatpush1.bf16.xpose.msra.mxu0 0
        %809 = vmatprep.subr.bf16.mxu0 0
        %810 = vmatpush1.bf16.xpose.msra.mxu0 0
        %811 = vmatprep.subr.bf16.mxu0 0
        %812 = vmatpush1.bf16.xpose.msra.mxu0 0
        %813 = vmatprep.subr.bf16.mxu0 0
        %814 = vmatpush1.bf16.xpose.msra.mxu0 0
        %815 = vmatprep.subr.bf16.mxu0 0
        %816 = vmatpush1.bf16.xpose.msra.mxu0 0
        %817 = vmatprep.subr.bf16.mxu0 0
        %818 = vmatpush1.bf16.xpose.msra.mxu0 0
        %819 = vmatprep.subr.bf16.mxu0 0
        %820 = vmatpush1.bf16.xpose.msra.mxu0 0
        %821 = vmatprep.subr.bf16.mxu0 0
        %822 = vmatpush1.bf16.xpose.msra.mxu0 0
        %823 = vmatprep.subr.bf16.mxu0 0
        %824 = vmatpush1.bf16.xpose.msra.mxu0 0
        %825 = vmatprep.subr.bf16.mxu0 0
        %826 = vmatpush1.bf16.xpose.msra.mxu0 0
        %827 = vmatprep.subr.bf16.mxu0 0
        %828 = vmatpush1.bf16.xpose.msra.mxu0 0
        %829 = vmatprep.subr.bf16.mxu0 0
        %830 = vmatpush1.bf16.xpose.msra.mxu0 0
        %831 = vmatprep.subr.bf16.mxu0 0
        %832 = vmatpush1.bf16.xpose.msra.mxu0 0
        %833 = vmatprep.subr.bf16.mxu0 0
        %834 = vmatpush1.bf16.xpose.msra.mxu0 0
        %835 = vmatprep.mubr.bf16.mxu0 0
        %836 = vmatmul.mubr.bf16.gmra.mrb[0].mxu0 %v798
        %v837 = vpop.f32.mrb[0].mxu0
        %v838 = vadd.f32 0.0, %v837
        %v839 = vpop.f32.mrb[0].mxu0
        %v840 = vpop.f32.mrb[0].mxu0
        %v841 = vpop.f32.mrb[0].mxu0
        %842 = vdwg.mxu0
        %844 = vrot.lane.b32.xlu0 %v792, 96
        %v845 = vpop.permute.xlu0 %844
        %v847 = vsel %vm796, %v790, 0
        %v850 = vsel %vm796, %v845, 0
        %852 = vmatprep.subr.bf16.mxu0 0
        %853 = vmatpush1.bf16.xpose.msra.mxu0 %v850
        %854 = vmatprep.subr.bf16.mxu0 0
        %855 = vmatpush1.bf16.xpose.msra.mxu0 0
        %856 = vmatprep.subr.bf16.mxu0 0
        %857 = vmatpush1.bf16.xpose.msra.mxu0 0
        %858 = vmatprep.subr.bf16.mxu0 0
        %859 = vmatpush1.bf16.xpose.msra.mxu0 0
        %860 = vmatprep.subr.bf16.mxu0 0
        %861 = vmatpush1.bf16.xpose.msra.mxu0 0
        %862 = vmatprep.subr.bf16.mxu0 0
        %863 = vmatpush1.bf16.xpose.msra.mxu0 0
        %864 = vmatprep.subr.bf16.mxu0 0
        %865 = vmatpush1.bf16.xpose.msra.mxu0 0
        %866 = vmatprep.subr.bf16.mxu0 0
        %867 = vmatpush1.bf16.xpose.msra.mxu0 0
        %868 = vmatprep.subr.bf16.mxu0 0
        %869 = vmatpush1.bf16.xpose.msra.mxu0 0
        %870 = vmatprep.subr.bf16.mxu0 0
        %871 = vmatpush1.bf16.xpose.msra.mxu0 0
        %872 = vmatprep.subr.bf16.mxu0 0
        %873 = vmatpush1.bf16.xpose.msra.mxu0 0
        %874 = vmatprep.subr.bf16.mxu0 0
        %875 = vmatpush1.bf16.xpose.msra.mxu0 0
        %876 = vmatprep.subr.bf16.mxu0 0
        %877 = vmatpush1.bf16.xpose.msra.mxu0 0
        %878 = vmatprep.subr.bf16.mxu0 0
        %879 = vmatpush1.bf16.xpose.msra.mxu0 0
        %880 = vmatprep.subr.bf16.mxu0 0
        %881 = vmatpush1.bf16.xpose.msra.mxu0 0
        %882 = vmatprep.subr.bf16.mxu0 0
        %883 = vmatpush1.bf16.xpose.msra.mxu0 0
        %884 = vmatprep.mubr.bf16.mxu0 0
        %885 = vmatmul.mubr.bf16.gmra.mrb[0].mxu0 %v847
        %v886 = vpop.f32.mrb[0].mxu0
        %v887 = vadd.f32 0.0, %v886
        %v888 = vpop.f32.mrb[0].mxu0
        %v889 = vpop.f32.mrb[0].mxu0
        %v890 = vpop.f32.mrb[0].mxu0
        %891 = vdwg.mxu0
        %vm892 = vcmask 64512
        %v893 = vsel %vm892, %v838, -inf
        %894 = vmax.xlane.f32.xlu0 %v893
        %v895 = vpop.xlane.xlu0 %894
        %v896 = vsel %vm892, %v887, -inf
        %897 = vmax.xlane.f32.xlu0 %v896
        %v898 = vpop.xlane.xlu0 %897
        %v899 = vsub.f32 %v838, %v895
        %v900 = vsub.f32 %v887, %v898
        %v901 = vmul.f32 %v899, 1.442695
        %v902 = vpow.pop %v901
        %v903 = vmul.f32 %v900, 1.442695
        %v904 = vpow.pop %v903
        %v905 = vsel %vm892, %v902, 0.0
        %906 = vadd.xlane.f32.xlu0 %v905
        %v907 = vpop.xlane.xlu0 %906
        %v908 = vsel %vm892, %v904, 0.0
        %909 = vadd.xlane.f32.xlu0 %v908
        %v910 = vpop.xlane.xlu0 %909
        %v911 = vrcp.pop %v907
        %v912 = vrcp.pop %v910
        %v913 = vmul.f32 %v902, %v911
        %v914 = vmul.f32 %v904, %v912
        %v915 = vpack.c.bf16 %v913, %v913
        %v916 = vpack.c.bf16 %v914, %v914
        %917 = vrot.lane.b32.xlu0 %v791, 64
        %v918 = vpop.permute.xlu0 %917
        %v920 = vsel %vm892, %v915, 0
        %vm922 = vcmask 1043456
        %v924 = vsel %vm922, %v918, 0
        %926 = vmatprep.subr.bf16.mxu0 0
        %927 = vmatpush1.bf16.msra.mxu0 %v924
        %928 = vmatprep.subr.bf16.mxu0 0
        %929 = vmatpush1.bf16.msra.mxu0 0
        %930 = vmatprep.subr.bf16.mxu0 0
        %931 = vmatpush1.bf16.msra.mxu0 0
        %932 = vmatprep.subr.bf16.mxu0 0
        %933 = vmatpush1.bf16.msra.mxu0 0
        %934 = vmatprep.subr.bf16.mxu0 0
        %935 = vmatpush1.bf16.msra.mxu0 0
        %936 = vmatprep.subr.bf16.mxu0 0
        %937 = vmatpush1.bf16.msra.mxu0 0
        %938 = vmatprep.subr.bf16.mxu0 0
        %939 = vmatpush1.bf16.msra.mxu0 0
        %940 = vmatprep.subr.bf16.mxu0 0
        %941 = vmatpush1.bf16.msra.mxu0 0
        %942 = vmatprep.subr.bf16.mxu0 0
        %943 = vmatpush1.bf16.msra.mxu0 0
        %944 = vmatprep.subr.bf16.mxu0 0
        %945 = vmatpush1.bf16.msra.mxu0 0
        %946 = vmatprep.subr.bf16.mxu0 0
        %947 = vmatpush1.bf16.msra.mxu0 0
        %948 = vmatprep.subr.bf16.mxu0 0
        %949 = vmatpush1.bf16.msra.mxu0 0
        %950 = vmatprep.subr.bf16.mxu0 0
        %951 = vmatpush1.bf16.msra.mxu0 0
        %952 = vmatprep.subr.bf16.mxu0 0
        %953 = vmatpush1.bf16.msra.mxu0 0
        %954 = vmatprep.subr.bf16.mxu0 0
        %955 = vmatpush1.bf16.msra.mxu0 0
        %956 = vmatprep.subr.bf16.mxu0 0
        %957 = vmatpush1.bf16.msra.mxu0 0
        %958 = vmatprep.mubr.bf16.mxu0 0
        %959 = vmatmul.mubr.bf16.gmra.mrb[0].mxu0 %v920
        %v960 = vpop.f32.mrb[0].mxu0
        %v961 = vadd.f32 0.0, %v960
        %v962 = vpop.f32.mrb[0].mxu0
        %v963 = vpop.f32.mrb[0].mxu0
        %v964 = vpop.f32.mrb[0].mxu0
        %965 = vdwg.mxu0
        %966 = vrot.lane.b32.xlu0 %v792, 64
        %v967 = vpop.permute.xlu0 %966
        %v969 = vsel %vm892, %v916, 0
        %v972 = vsel %vm922, %v967, 0
        %974 = vmatprep.subr.bf16.mxu0 0
        %975 = vmatpush1.bf16.msra.mxu0 %v972
        %976 = vmatprep.subr.bf16.mxu0 0
        %977 = vmatpush1.bf16.msra.mxu0 0
        %978 = vmatprep.subr.bf16.mxu0 0
        %979 = vmatpush1.bf16.msra.mxu0 0
        %980 = vmatprep.subr.bf16.mxu0 0
        %981 = vmatpush1.bf16.msra.mxu0 0
        %982 = vmatprep.subr.bf16.mxu0 0
        %983 = vmatpush1.bf16.msra.mxu0 0
        %984 = vmatprep.subr.bf16.mxu0 0
        %985 = vmatpush1.bf16.msra.mxu0 0
        %986 = vmatprep.subr.bf16.mxu0 0
        %987 = vmatpush1.bf16.msra.mxu0 0
        %988 = vmatprep.subr.bf16.mxu0 0
        %989 = vmatpush1.bf16.msra.mxu0 0
        %990 = vmatprep.subr.bf16.mxu0 0
        %991 = vmatpush1.bf16.msra.mxu0 0
        %992 = vmatprep.subr.bf16.mxu0 0
        %993 = vmatpush1.bf16.msra.mxu0 0
        %994 = vmatprep.subr.bf16.mxu0 0
        %995 = vmatpush1.bf16.msra.mxu0 0
        %996 = vmatprep.subr.bf16.mxu0 0
        %997 = vmatpush1.bf16.msra.mxu0 0
        %998 = vmatprep.subr.bf16.mxu0 0
        %999 = vmatpush1.bf16.msra.mxu0 0
        %1000 = vmatprep.subr.bf16.mxu0 0
        %1001 = vmatpush1.bf16.msra.mxu0 0
        %1002 = vmatprep.subr.bf16.mxu0 0
        %1003 = vmatpush1.bf16.msra.mxu0 0
        %1004 = vmatprep.subr.bf16.mxu0 0
        %1005 = vmatpush1.bf16.msra.mxu0 0
        %1006 = vmatprep.mubr.bf16.mxu0 0
        %1007 = vmatmul.mubr.bf16.gmra.mrb[0].mxu0 %v969
        %v1008 = vpop.f32.mrb[0].mxu0
        %v1009 = vadd.f32 0.0, %v1008
        %v1010 = vpop.f32.mrb[0].mxu0
        %v1011 = vpop.f32.mrb[0].mxu0
        %v1012 = vpop.f32.mrb[0].mxu0
        %1013 = vdwg.mxu0
        %v1014 = vpack.c.bf16 %v1009, %v961
        %v1015 = vpack.c.bf16 %v268, %v267
        %v1016 = vpack.c.bf16 %v270, %v269
        %v1018 = vsel %vm796, %v1014, 0
        %1020 = vmatprep.subr.bf16.mxu0 0
        %1021 = vmatpush1.bf16.msra.mxu0 %v1015
        %1022 = vmatprep.subr.bf16.mxu0 0
        %1023 = vmatpush1.bf16.msra.mxu0 %v1016
        %1024 = vmatprep.subr.bf16.mxu0 0
        %1025 = vmatpush1.bf16.msra.mxu0 0
        %1026 = vmatprep.subr.bf16.mxu0 0
        %1027 = vmatpush1.bf16.msra.mxu0 0
        %1028 = vmatprep.subr.bf16.mxu0 0
        %1029 = vmatpush1.bf16.msra.mxu0 0
        %1030 = vmatprep.subr.bf16.mxu0 0
        %1031 = vmatpush1.bf16.msra.mxu0 0
        %1032 = vmatprep.subr.bf16.mxu0 0
        %1033 = vmatpush1.bf16.msra.mxu0 0
        %1034 = vmatprep.subr.bf16.mxu0 0
        %1035 = vmatpush1.bf16.msra.mxu0 0
        %1036 = vmatprep.subr.bf16.mxu0 0
        %1037 = vmatpush1.bf16.msra.mxu0 0
        %1038 = vmatprep.subr.bf16.mxu0 0
        %1039 = vmatpush1.bf16.msra.mxu0 0
        %1040 = vmatprep.subr.bf16.mxu0 0
        %1041 = vmatpush1.bf16.msra.mxu0 0
        %1042 = vmatprep.subr.bf16.mxu0 0
        %1043 = vmatpush1.bf16.msra.mxu0 0
        %1044 = vmatprep.subr.bf16.mxu0 0
        %1045 = vmatpush1.bf16.msra.mxu0 0
        %1046 = vmatprep.subr.bf16.mxu0 0
        %1047 = vmatpush1.bf16.msra.mxu0 0
        %1048 = vmatprep.subr.bf16.mxu0 0
        %1049 = vmatpush1.bf16.msra.mxu0 0
        %1050 = vmatprep.subr.bf16.mxu0 0
        %1051 = vmatpush1.bf16.msra.mxu0 0
        %1052 = vmatprep.mubr.bf16.mxu0 0
        %1053 = vmatmul.mubr.bf16.gmra.mrb[0].mxu0 %v1018
        %v1054 = vpop.f32.mrb[0].mxu0
        %v1055 = vadd.f32 0.0, %v1054
        %v1056 = vpop.f32.mrb[0].mxu0
        %v1057 = vpop.f32.mrb[0].mxu0
        %v1058 = vadd.f32 0.0, %v1057
        %v1059 = vpop.f32.mrb[0].mxu0
        %1060 = vdwg.mxu0
        %1063 = vrot.lane.b32.xlu0 %v1055, 96
        %v1064 = vpop.permute.xlu0 %1063
        %1065 = vrot.lane.b32.xlu0 %v1058, 96
        %v1066 = vpop.permute.xlu0 %1065
        %v1069 = vadd.f32 %v783, %v1064
        %v1070 = vadd.f32 %v786, %v1066
        %v1071 = vlaneseq
        %v1072 = vshrl.u32 %v1071, 7
        %v1073 = vsub.s32 0, %v1072
        %v1074 = vrot.slane %v271, %v1073
        %1076 = vrot.lane.b32.xlu0 %v1074, 96
        %v1077 = vpop.permute.xlu0 %1076
        %v1079 = vadd.f32 %v1069, %v1077
        %v1080 = vadd.f32 %v1070, %v1077
        %v1081 = vmax.f32 %v1079, 0.0
        %v1082 = vmax.f32 %v1080, 0.0
        %v1083 = vpack.c.bf16 %v1082, %v1081
        %v1084 = vpack.c.bf16 %v273, %v272
        %v1085 = vpack.c.bf16 %v275, %v274
        %v1086 = vlaneseq
        %v1087 = vshrl.u32 %v1086, 7
        %v1088 = vsub.s32 0, %v1087
        %v1089 = vrot.slane %v276, %v1088
        %1091 = vrot.lane.b32.xlu0 %v1083, 32
        %v1092 = vpop.permute.xlu0 %1091
        %v1094 = vsel %vm796, %v1092, 0
        %1096 = vmatprep.subr.bf16.mxu0 0
        %1097 = vmatpush1.bf16.msra.mxu0 %v1084
        %1098 = vmatprep.subr.bf16.mxu0 0
        %1099 = vmatpush1.bf16.msra.mxu0 %v1085
        %1100 = vmatprep.subr.bf16.mxu0 0
        %1101 = vmatpush1.bf16.msra.mxu0 0
        %1102 = vmatprep.subr.bf16.mxu0 0
        %1103 = vmatpush1.bf16.msra.mxu0 0
        %1104 = vmatprep.subr.bf16.mxu0 0
        %1105 = vmatpush1.bf16.msra.mxu0 0
        %1106 = vmatprep.subr.bf16.mxu0 0
        %1107 = vmatpush1.bf16.msra.mxu0 0
        %1108 = vmatprep.subr.bf16.mxu0 0
        %1109 = vmatpush1.bf16.msra.mxu0 0
        %1110 = vmatprep.subr.bf16.mxu0 0
        %1111 = vmatpush1.bf16.msra.mxu0 0
        %1112 = vmatprep.subr.bf16.mxu0 0
        %1113 = vmatpush1.bf16.msra.mxu0 0
        %1114 = vmatprep.subr.bf16.mxu0 0
        %1115 = vmatpush1.bf16.msra.mxu0 0
        %1116 = vmatprep.subr.bf16.mxu0 0
        %1117 = vmatpush1.bf16.msra.mxu0 0
        %1118 = vmatprep.subr.bf16.mxu0 0
        %1119 = vmatpush1.bf16.msra.mxu0 0
        %1120 = vmatprep.subr.bf16.mxu0 0
        %1121 = vmatpush1.bf16.msra.mxu0 0
        %1122 = vmatprep.subr.bf16.mxu0 0
        %1123 = vmatpush1.bf16.msra.mxu0 0
        %1124 = vmatprep.subr.bf16.mxu0 0
        %1125 = vmatpush1.bf16.msra.mxu0 0
        %1126 = vmatprep.subr.bf16.mxu0 0
        %1127 = vmatpush1.bf16.msra.mxu0 0
        %1128 = vmatprep.mubr.bf16.mxu0 0
        %1129 = vmatmul.mubr.bf16.gmra.mrb[0].mxu0 %v1094
        %v1130 = vpop.f32.mrb[0].mxu0
        %v1131 = vadd.f32 %v1089, %v1130
        %v1132 = vpop.f32.mrb[0].mxu0
        %v1133 = vpop.f32.mrb[0].mxu0
        %v1134 = vadd.f32 %v1089, %v1133
        %v1135 = vpop.f32.mrb[0].mxu0
        %1136 = vdwg.mxu0
        %v1137 = vlaneseq
        %v1138 = vand.u32 %v1137, 127
        %v1139 = vcvt.s32.f32 %v1138
        %v1140 = vmul.f32 %v1139, 0.625
        %v1141 = vadd.f32 %v1140, -10.0
        %1143 = vset.pattern.permute.xlu0 0
        %1144 = vperm.xlu0 %1143, %v679
        %v1145 = vpop.permute.xlu0 %1144
        %1148 = vset.pattern.permute.xlu0 0
        %1149 = vperm.xlu0 %1148, %v680
        %v1150 = vpop.permute.xlu0 %1149
        %v1152 = vsub.f32 %v1141, %v1145
        %v1153 = vsub.f32 %v1141, %v1150
        %v1154 = vmul.f32 %v1152, 1.4142135
        %v1155 = vmul.f32 %v1153, 1.4142135
        %vm1156 = vcmp.ge.f32.partialorder %v1154, 0.0
        %vm1157 = vcmp.ge.f32.partialorder %v1155, 0.0
        %v1158 = vsel %vm1156, 1.0, -1.0
        %v1159 = vsel %vm1157, 1.0, -1.0
        %v1160 = vand.u32 2147483647, %v1154
        %v1161 = vand.u32 2147483647, %v1155
        %v1162 = vmul.f32 %v1160, 0.3275911
        %v1163 = vmul.f32 %v1161, 0.3275911
        %v1164 = vadd.f32 %v1162, 1.0
        %v1165 = vadd.f32 %v1163, 1.0
        %v1166 = vrcp.pop %v1164
        %v1167 = vrcp.pop %v1165
        %v1168 = vmul.f32 %v1166, 1.0614054
        %v1169 = vmul.f32 %v1167, 1.0614054
        %v1170 = vadd.f32 %v1168, -1.4531521
        %v1171 = vadd.f32 %v1169, -1.4531521
        %v1172 = vmul.f32 %v1170, %v1166
        %v1173 = vmul.f32 %v1171, %v1167
        %v1174 = vadd.f32 %v1172, 1.4214138
        %v1175 = vadd.f32 %v1173, 1.4214138
        %v1176 = vmul.f32 %v1174, %v1166
        %v1177 = vmul.f32 %v1175, %v1167
        %v1178 = vadd.f32 %v1176, -0.28449672
        %v1179 = vadd.f32 %v1177, -0.28449672
        %v1180 = vmul.f32 %v1178, %v1166
        %v1181 = vmul.f32 %v1179, %v1167
        %v1182 = vadd.f32 %v1180, 0.2548296
        %v1183 = vadd.f32 %v1181, 0.2548296
        %v1184 = vmul.f32 %v1182, %v1166
        %v1185 = vmul.f32 %v1183, %v1167
        %v1186 = vsub.f32 0.0, %v1160
        %v1187 = vsub.f32 0.0, %v1161
        %v1188 = vmul.f32 %v1186, %v1160
        %v1189 = vmul.f32 %v1187, %v1161
        %v1190 = vmul.f32 %v1188, 1.442695
        %v1191 = vpow.pop %v1190
        %v1192 = vmul.f32 %v1189, 1.442695
        %v1193 = vpow.pop %v1192
        %v1194 = vmul.f32 %v1184, %v1191
        %v1195 = vmul.f32 %v1185, %v1193
        %v1196 = vsub.f32 1.0, %v1194
        %v1197 = vsub.f32 1.0, %v1195
        %v1198 = vmul.f32 %v1158, %v1196
        %v1199 = vmul.f32 %v1159, %v1197
        %v1200 = vadd.f32 %v1198, 1.0
        %v1201 = vadd.f32 %v1199, 1.0
        %v1202 = vmul.f32 %v1200, 0.5
        %v1203 = vmul.f32 %v1201, 0.5
        %1206 = vrot.lane.b32.xlu0 %v1202, 1
        %v1207 = vpop.permute.xlu0 %1206
        %1208 = vrot.lane.b32.xlu0 %v1203, 1
        %v1209 = vpop.permute.xlu0 %1208
        %v1212 = vsub.f32 %v1202, %v1207
        %v1213 = vsub.f32 %v1203, %v1209
        %1216 = vrot.lane.b32.xlu0 %v1212, 127
        %v1217 = vpop.permute.xlu0 %1216
        %1218 = vrot.lane.b32.xlu0 %v1213, 127
        %v1219 = vpop.permute.xlu0 %1218
        %v1222 = vsel %vm796, %v1217, 0.0
        %1223 = vadd.xlane.f32.xlu0 %v1222
        %v1224 = vpop.xlane.xlu0 %1223
        %v1225 = vsel %vm796, %v1219, 0.0
        %1226 = vadd.xlane.f32.xlu0 %v1225
        %v1227 = vpop.xlane.xlu0 %1226
        %v1228 = vadd.f32 %v1224, 1e-08
        %v1229 = vadd.f32 %v1227, 1e-08
        %v1230 = vrcp.pop %v1228
        %v1231 = vrcp.pop %v1229
        %v1232 = vmul.f32 %v1212, %v1230
        %v1233 = vmul.f32 %v1213, %v1231
        %v1234 = vsel %vm796, %v1131, -inf
        %1235 = vmax.xlane.f32.xlu0 %v1234
        %v1236 = vpop.xlane.xlu0 %1235
        %v1237 = vsel %vm796, %v1134, -inf
        %1238 = vmax.xlane.f32.xlu0 %v1237
        %v1239 = vpop.xlane.xlu0 %1238
        %v1240 = vsub.f32 %v1131, %v1236
        %v1241 = vsub.f32 %v1134, %v1239
        %v1242 = vmul.f32 %v1240, 1.442695
        %v1243 = vpow.pop %v1242
        %v1244 = vmul.f32 %v1241, 1.442695
        %v1245 = vpow.pop %v1244
        %v1246 = vsel %vm796, %v1243, 0.0
        %1247 = vadd.xlane.f32.xlu0 %v1246
        %v1248 = vpop.xlane.xlu0 %1247
        %v1249 = vsel %vm796, %v1245, 0.0
        %1250 = vadd.xlane.f32.xlu0 %v1249
        %v1251 = vpop.xlane.xlu0 %1250
        %v1252 = vlog2.pop %v1248
        %v1253 = vmul.f32 %v1252, 0.6931472
        %v1254 = vlog2.pop %v1251
        %v1255 = vmul.f32 %v1254, 0.6931472
        %v1256 = vsub.f32 %v1240, %v1253
        %v1257 = vsub.f32 %v1241, %v1255
        %1260 = vrot.lane.b32.xlu0 %v1256, 1
        %v1261 = vpop.permute.xlu0 %1260
        %1262 = vrot.lane.b32.xlu0 %v1257, 1
        %v1263 = vpop.permute.xlu0 %1262
        %v1266 = vmul.f32 %v1232, %v1261
        %v1267 = vmul.f32 %v1233, %v1263
        %1270 = vrot.lane.b32.xlu0 %v1266, 127
        %v1271 = vpop.permute.xlu0 %1270
        %1272 = vrot.lane.b32.xlu0 %v1267, 127
        %v1273 = vpop.permute.xlu0 %1272
        %v1276 = vsel %vm796, %v1271, 0.0
        %1277 = vadd.xlane.f32.xlu0 %v1276
        %v1278 = vpop.xlane.xlu0 %1277
        %v1279 = vsel %vm796, %v1273, 0.0
        %1280 = vadd.xlane.f32.xlu0 %v1279
        %v1281 = vpop.xlane.xlu0 %1280
        %v1282 = vsub.f32 0.0, %v1278
        %v1283 = vsub.f32 0.0, %v1281
        %v1284 = vrot.slane %v1282, 4
        %v1285 = vadd.f32 %v1282, %v1284
        %v1286 = vrot.slane %v1285, 2
        %v1287 = vadd.f32 %v1285, %v1286
        %v1288 = vrot.slane %v1287, 1
        %v1289 = vadd.f32 %v1287, %v1288
        %v1290 = vrot.slane %v1283, 4
        %v1291 = vadd.f32 %v1283, %v1290
        %v1292 = vrot.slane %v1291, 2
        %v1293 = vadd.f32 %v1291, %v1292
        %v1294 = vrot.slane %v1293, 1
        %v1295 = vadd.f32 %v1293, %v1294
        %v1296 = vmul.f32 %v1289, 0.125
        %v1297 = vmul.f32 %v1295, 0.125
        %vm1300 = vcmask 1041409
        %v1301 = vsel %vm1300, %v1297, %v1296
        %1303 = vst [vmem:[%s242] sm:$0x3] %v1301
        %s1304 = sand.u32 %s104, 1
        %s1305 = scalar_lea.sflag [#allocation4], %s1304
        %s1306 = sand.u32 %s104, 1
        %s1307 = smul.addr %s1306, 2
        %s1308 = scalar_lea.vmem [#allocation8], %s1307
        // Predicated region
        $region45: #{tpu_custom_call.1} parent=31 // pred_check
          %p1309 = pneg %p114
        $region46: #{tpu_custom_call.1} parent=31 // pred_check_branch
          %1311 = sbr.rel (%p1309) target = $region48
        $region47: #{tpu_custom_call.1} parent=31 // pred_region
          %s1313 = ssub.s32 32, 32
          %1314 = vsyncadd %s1305, %s1313
          %s1315 = smul.addr %s23, 32
          %s1316 = scalar_lea.hbm %s3, %s1315
          %s1318 = sshll.u32 %s1308, 4
          %s1319 = int_to_ptr.vmem [resolvable:$true] %s1318
          %1321 = dma.vmem_to_hbm [thread:$0]  %s1319, 32, %s1316, %s1305
        $region48: #{tpu_custom_call.1} parent=31 // pred_fallthru
          _
      $region32: #{tpu_custom_call.1} parent=5 // pred_fallthru
        _
      %p1322 = scmp.le.s32.totalorder 2, %s18
      // Predicated region
      $region49: #{tpu_custom_call.1} parent=5 // pred_check
        %p1323 = pneg %p1322
      $region50: #{tpu_custom_call.1} parent=5 // pred_check_branch
        %1325 = sbr.rel (%p1323) target = $region52
      $region51: #{tpu_custom_call.1} parent=5 // pred_region
        %s1326 = ssub.s32 %s18, 2
        // Predicated region
        $region53: #{tpu_custom_call.1} parent=51 // pred_check
          %p1327 = pneg %p120
        $region54: #{tpu_custom_call.1} parent=51 // pred_check_branch
          %1329 = sbr.rel (%p1327) target = $region56
        $region55: #{tpu_custom_call.1} parent=51 // pred_region
          %s1330 = sand.u32 %s105, 1
          %s1331 = scalar_lea.sflag [#allocation4], %s1330
          %s1332 = sand.u32 %s105, 1
          %s1333 = smul.addr %s1332, 2
          %s1334 = scalar_lea.vmem [#allocation8], %s1333
          %1335 = dma.done %s1331, 32
        $region56: #{tpu_custom_call.1} parent=51 // pred_fallthru
          _
      $region52: #{tpu_custom_call.1} parent=5 // pred_fallthru
        _
    $region6: #{tpu_custom_call.1} parent=1 // loop_footer
      %s22 = sadd.s32 1, %s18
    $region7: #{tpu_custom_call.1} parent=1 // loop_footer_branch
      %17 = sbr.rel target = $region3
    $region8: #{tpu_custom_call.1} parent=1 // loop_exit
      _
    %1336 = vsyncpa [#allocation3], 1
    %s1337 = scalar_lea.sflag [#allocation3], 1
    %1338 = vsyncpa %s1337, 1
    %1339 = vsyncpa [#allocation6], 1
    %s1340 = scalar_lea.sflag [#allocation6], 1
    %1341 = vsyncpa %s1340, 1
    %1342 = vsyncpa [#allocation4], 1
    %s1343 = scalar_lea.sflag [#allocation4], 1
    %1344 = vsyncpa %s1343, 1

</llo_original>
